<compile_context>
chip_gen: v7x
topology: tpu7x:2x2x1
jax: 0.10.0
libtpu: 0.0.40
codegen_flags: <defaults>
</compile_context>

<pallas_src>
import jax
import jax.numpy as jnp
import numpy as np
from jax.experimental import pallas as pl
from jax.experimental.pallas import tpu as pltpu


def _round_up(x, m):
    return pl.cdiv(x, m) * m


def _device_kind():
    try:
        return jax.devices()[0].device_kind.lower()
    except Exception:
        return ""


def _pick_vmem_limit_bytes():
    """~60% of the chip's VMEM capacity, clamped to [16 MiB, 96 MiB]."""
    cap = None
    try:
        cap = int(getattr(pltpu.get_tpu_info(), "vmem_capacity_bytes"))
    except Exception:
        cap = None
    if cap is None or cap <= 0:
        cap = 64 * 1024 * 1024 if "v7" in _device_kind() else 128 * 1024 * 1024
    return max(16 * 1024 * 1024, min(int(0.6 * cap), 96 * 1024 * 1024))


def _make_vdp_mlp_kernel(n_linear, matmul_dtype):
    """Whole VDP MLP (all linears + ReLUs) fused into one kernel body.

    Per layer the kernel receives 3 refs:
      w_mu   : (in_p, out_p)             matmul dtype
      w_sig  : layer 0 -> softplus(W_sig) (in_p, out_p)
               layer >0 -> [softplus(W_sig); W_mu^2] stacked along K (2*in_p, out_p)
      b      : (1, out_p) f32
    """

    def kernel(*refs):
        mu_ref = refs[0]
        p = refs[1:1 + 3 * n_linear]
        mu_out_ref = refs[1 + 3 * n_linear]
        sig_out_ref = refs[2 + 3 * n_linear]

        mu = mu_ref[...]          # f32 (block_b, in_p)
        sigma = None              # first vdp.Linear has input_flag=True -> sigma_x == 0

        for li in range(n_linear):
            w_mu = p[3 * li][...]
            w_sig = p[3 * li + 1][...]
            b = p[3 * li + 2][...]

            new_mu = jnp.dot(mu.astype(matmul_dtype), w_mu,
                             preferred_element_type=jnp.float32) + b

            if sigma is None:
                var_in = (mu * mu).astype(matmul_dtype)
                new_sig = jnp.dot(var_in, w_sig, preferred_element_type=jnp.float32)
            else:
                # single K-stacked matmul:
                #   sigma_y = [mu^2 + sigma, sigma] @ [softplus(W_sig); W_mu^2]
                var_cat = jnp.concatenate([mu * mu + sigma, sigma],
                                          axis=-1).astype(matmul_dtype)
                new_sig = jnp.dot(var_cat, w_sig, preferred_element_type=jnp.float32)
            mu, sigma = new_mu, new_sig

            if li < n_linear - 1:
                # vdp ReLU: first-order moment propagation (elementwise kept in f32)
                pos = mu > 0.0
                mu = jnp.maximum(mu, 0.0)
                sigma = jnp.where(pos, sigma, 0.0)

        mu_out_ref[...] = mu
        sig_out_ref[...] = sigma

    return kernel


def _prepare_params(params, *, pad_to, matmul_dtype):
    """Precompute softplus(W_sig), W_mu^2 and the K-stacked sigma weight once in the
    wrapper; zero-pad all feature dims to multiples of `pad_to`."""
    prepared = []
    for li, (w_mu, w_sig_raw, b) in enumerate(params):
        fan_in, fan_out = w_mu.shape
        in_p = _round_up(fan_in, pad_to)
        out_p = _round_up(fan_out, pad_to)

        # softplus BEFORE padding -> padded entries are exactly 0 (not softplus(0)).
        w_sig_sp = jax.nn.softplus(w_sig_raw)
        w_mu_sq = w_mu * w_mu

        def pad2(a):
            return jnp.pad(a, ((0, in_p - fan_in), (0, out_p - fan_out)))

        w_mu_p = pad2(w_mu).astype(matmul_dtype)
        if li == 0:
            w_sig_p = pad2(w_sig_sp).astype(matmul_dtype)
        else:
            # stacked along K: (2*in_p, out_p)
            w_sig_p = jnp.concatenate([pad2(w_sig_sp), pad2(w_mu_sq)],
                                      axis=0).astype(matmul_dtype)
        b_p = jnp.pad(b, ((0, 0), (0, out_p - fan_out))).astype(jnp.float32)
        prepared.append((w_mu_p, w_sig_p, b_p))
    return prepared


def _pick_block_b(B, *, kind):
    """Split the batch as evenly as possible into lane/MXU-friendly tiles."""
    is_v7 = "v7" in kind
    max_tile = 256 if ("v6" in kind or "v7" in kind) else 128
    n_tiles = pl.cdiv(B, max_tile)
    if is_v7 and n_tiles < 2 and B >= 16:
        n_tiles = 2  # v7x: two TensorCores; need >=2 "parallel" grid steps
    return int(_round_up(pl.cdiv(B, n_tiles), 8))


def dense_model_forward(mu_x, params, *, block_b=None, matmul_dtype=jnp.bfloat16,
                        pad_to=128):
    """params: list of (w_mu[in,out], w_sig_raw[in,out], b[1,out]) per vdp.Linear.

    Returns (mu_y, sigma_y), each (B, prod(output_shape)).
    """
    B, in_f = mu_x.shape
    n_linear = len(params)
    assert n_linear >= 1, "DenseModel always has at least one vdp.Linear"
    out_f = params[-1][0].shape[1]

    prepared = _prepare_params(params, pad_to=pad_to, matmul_dtype=matmul_dtype)
    in_p = prepared[0][0].shape[0]
    out_p = prepared[-1][0].shape[1]

    kind = _device_kind()
    if block_b is None:
        block_b = _pick_block_b(B, kind=kind)
    B_pad = int(_round_up(B, block_b))

    mu_x_p = mu_x.astype(jnp.float32)
    if B_pad != B or in_p != in_f:
        mu_x_p = jnp.pad(mu_x_p, ((0, B_pad - B), (0, in_p - in_f)))

    flat_params = []
    for triple in prepared:
        flat_params.extend(triple)

    out_specs = [pl.BlockSpec((block_b, out_p), lambda i: (i, 0)),
                 pl.BlockSpec((block_b, out_p), lambda i: (i, 0))]
    out_shape = [jax.ShapeDtypeStruct((B_pad, out_p), jnp.float32),
                 jax.ShapeDtypeStruct((B_pad, out_p), jnp.float32)]
    compiler_params = pltpu.CompilerParams(
        dimension_semantics=("parallel",),
        vmem_limit_bytes=_pick_vmem_limit_bytes(),
    )

    def _call(single_buffer_weights):
        in_specs = [pl.BlockSpec((block_b, in_p), lambda i: (i, 0))]
        for arr in flat_params:
            r, c = arr.shape
            # Constant block index -> grid-invariant weights; single-buffer them to
            # halve their VMEM footprint (they never need a prefetch buffer).
            if single_buffer_weights and hasattr(pl, "Buffered"):
                spec = pl.BlockSpec((r, c), lambda i: (0, 0),
                                    pipeline_mode=pl.Buffered(1))
            else:
                spec = pl.BlockSpec((r, c), lambda i: (0, 0))
            in_specs.append(spec)
        return pl.pallas_call(
            _make_vdp_mlp_kernel(n_linear, matmul_dtype),
            grid=(B_pad // block_b,),
            in_specs=in_specs,
            out_specs=out_specs,
            out_shape=out_shape,
            compiler_params=compiler_params,
        )(mu_x_p, *flat_params)

    try:
        mu_y, sig_y = _call(True)
    except Exception:
        # Fallback if this runtime rejects single-buffered (Buffered(1)) BlockSpecs.
        mu_y, sig_y = _call(False)

    # Strip batch + lane padding.
    return mu_y[:B, :out_f], sig_y[:B, :out_f]


def init_dense_model_params(key, input_size, output_shape, layers, node_size):
    """Deterministic synthetic init matching DenseModel.build_model layer shapes."""
    out_size = int(np.prod(output_shape))
    dims = [input_size] + [node_size] * layers + [out_size]
    params = []
    for i in range(len(dims) - 1):
        fan_in, fan_out = dims[i], dims[i + 1]
        key, k1, k2, k3 = jax.random.split(key, 4)
        w_mu = (jax.random.normal(k1, (fan_in, fan_out), jnp.float32)
                / jnp.sqrt(jnp.float32(fan_in)))
        w_sig = -3.0 + 0.1 * jax.random.normal(k2, (fan_in, fan_out), jnp.float32)
        b = 0.01 * jax.random.normal(k3, (1, fan_out), jnp.float32)
        params.append((w_mu, w_sig, b))
    return params


def _reference_forward(mu_x, params):
    """Plain-JAX f32 reference of the original (unfused) VDP math."""
    mu, sigma = mu_x, None
    n = len(params)
    for li, (w_mu, w_sig_raw, b) in enumerate(params):
        w_sig = jax.nn.softplus(w_sig_raw)
        new_mu = mu @ w_mu + b
        new_sig = (mu * mu) @ w_sig
        if sigma is not None:
            new_sig = new_sig + sigma @ (w_mu * w_mu) + sigma @ w_sig
        mu, sigma = new_mu, new_sig
        if li < n - 1:
            gate = (mu > 0.0).astype(jnp.float32)
            mu, sigma = mu * gate, sigma * gate
    return mu, sigma


if __name__ == "__main__":
    # Small shapes consistent with the module: (B, input_size) in, prod(output_shape) out.
    B = 16
    input_size = 32
    node_size = 32
    layers = 2
    output_shape = (8,)

    key = jax.random.PRNGKey(0)
    key, kx = jax.random.split(key)
    mu_x = jax.random.normal(kx, (B, input_size), jnp.float32)

    params = init_dense_model_params(key, input_size, output_shape, layers, node_size)
    mu_ref, sig_ref = _reference_forward(mu_x, params)

    # 1) f32 matmul path: strict correctness check.
    mu_y32, sig_y32 = dense_model_forward(mu_x, params, matmul_dtype=jnp.float32)
    jax.block_until_ready((mu_y32, sig_y32))
    np.testing.assert_allclose(np.asarray(mu_y32), np.asarray(mu_ref), rtol=1e-5, atol=1e-5)
    np.testing.assert_allclose(np.asarray(sig_y32), np.asarray(sig_ref), rtol=1e-5, atol=1e-5)

    # 2) default bf16 MXU path: f32 accumulation, bf16-level tolerance.
    mu_yb, sig_yb = dense_model_forward(mu_x, params)
    jax.block_until_ready((mu_yb, sig_yb))
    np.testing.assert_allclose(np.asarray(mu_yb), np.asarray(mu_ref), rtol=5e-2, atol=5e-2)
    np.testing.assert_allclose(np.asarray(sig_yb), np.asarray(sig_ref), rtol=5e-2, atol=5e-2)

    assert mu_yb.shape == (B, int(np.prod(output_shape)))
    assert sig_yb.shape == (B, int(np.prod(output_shape)))

    print("KERNEL_OK")
</pallas_src>

<mosaic_0001>
module attributes {stable_mosaic.version = 11 : i64} {
  func.func @kernel(%arg0: i32, %arg1: memref<16x128xf32, #tpu.memory_space<vmem>>, %arg2: memref<128x128xf32, #tpu.memory_space<vmem>>, %arg3: memref<128x128xf32, #tpu.memory_space<vmem>>, %arg4: memref<1x128xf32, #tpu.memory_space<vmem>>, %arg5: memref<128x128xf32, #tpu.memory_space<vmem>>, %arg6: memref<256x128xf32, #tpu.memory_space<vmem>>, %arg7: memref<1x128xf32, #tpu.memory_space<vmem>>, %arg8: memref<128x128xf32, #tpu.memory_space<vmem>>, %arg9: memref<256x128xf32, #tpu.memory_space<vmem>>, %arg10: memref<1x128xf32, #tpu.memory_space<vmem>>, %arg11: memref<16x128xf32, #tpu.memory_space<vmem>>, %arg12: memref<16x128xf32, #tpu.memory_space<vmem>>) attributes {dimension_semantics = [#tpu.dimension_semantics<parallel>], iteration_bounds = array<i64: 1>, scalar_prefetch = 0 : i64, scratch_operands = 0 : i64, tpu.core_type = #tpu.core_type<tc>, window_params = [{transform_indices = @transform_0, window_bounds = array<i64: 16, 128>}, {pipeline_mode = #tpu.pipeline_mode<synchronous>, transform_indices = @transform_1, window_bounds = array<i64: 128, 128>}, {pipeline_mode = #tpu.pipeline_mode<synchronous>, transform_indices = @transform_2, window_bounds = array<i64: 128, 128>}, {pipeline_mode = #tpu.pipeline_mode<synchronous>, transform_indices = @transform_3, window_bounds = array<i64: 1, 128>}, {pipeline_mode = #tpu.pipeline_mode<synchronous>, transform_indices = @transform_4, window_bounds = array<i64: 128, 128>}, {pipeline_mode = #tpu.pipeline_mode<synchronous>, transform_indices = @transform_5, window_bounds = array<i64: 256, 128>}, {pipeline_mode = #tpu.pipeline_mode<synchronous>, transform_indices = @transform_6, window_bounds = array<i64: 1, 128>}, {pipeline_mode = #tpu.pipeline_mode<synchronous>, transform_indices = @transform_7, window_bounds = array<i64: 128, 128>}, {pipeline_mode = #tpu.pipeline_mode<synchronous>, transform_indices = @transform_8, window_bounds = array<i64: 256, 128>}, {pipeline_mode = #tpu.pipeline_mode<synchronous>, transform_indices = @transform_9, window_bounds = array<i64: 1, 128>}, {transform_indices = @transform_10, window_bounds = array<i64: 16, 128>}, {transform_indices = @transform_11, window_bounds = array<i64: 16, 128>}]} {
    %c0 = arith.constant 0 : index
    %c0_0 = arith.constant 0 : index
    %0 = vector.load %arg1[%c0, %c0_0] : memref<16x128xf32, #tpu.memory_space<vmem>>, vector<16x128xf32>
    %c0_1 = arith.constant 0 : index
    %c0_2 = arith.constant 0 : index
    %1 = vector.load %arg2[%c0_1, %c0_2] : memref<128x128xf32, #tpu.memory_space<vmem>>, vector<128x128xf32>
    %c0_3 = arith.constant 0 : index
    %c0_4 = arith.constant 0 : index
    %2 = vector.load %arg3[%c0_3, %c0_4] : memref<128x128xf32, #tpu.memory_space<vmem>>, vector<128x128xf32>
    %c0_5 = arith.constant 0 : index
    %c0_6 = arith.constant 0 : index
    %3 = vector.load %arg4[%c0_5, %c0_6] : memref<1x128xf32, #tpu.memory_space<vmem>>, vector<1x128xf32>
    %cst = arith.constant dense<0.000000e+00> : vector<16x128xf32>
    %4 = tpu.matmul %0, %1, %cst {dimension_numbers = #tpu.dot_dimension_numbers<[1], [0], [0], [1], [0, 0, 1, 1], [], []>} : vector<16x128xf32>, vector<128x128xf32>, vector<16x128xf32> -> vector<16x128xf32>
    %5 = vector.broadcast %3 : vector<1x128xf32> to vector<16x128xf32>
    %6 = arith.addf %4, %5 : vector<16x128xf32>
    %7 = arith.mulf %0, %0 : vector<16x128xf32>
    %cst_7 = arith.constant dense<0.000000e+00> : vector<16x128xf32>
    %8 = tpu.matmul %7, %2, %cst_7 {dimension_numbers = #tpu.dot_dimension_numbers<[1], [0], [0], [1], [0, 0, 1, 1], [], []>} : vector<16x128xf32>, vector<128x128xf32>, vector<16x128xf32> -> vector<16x128xf32>
    %cst_8 = arith.constant 0.000000e+00 : f32
    %9 = vector.broadcast %cst_8 : f32 to vector<16x128xf32>
    %10 = arith.cmpf ogt, %6, %9 : vector<16x128xf32>
    %cst_9 = arith.constant 0.000000e+00 : f32
    %11 = vector.broadcast %cst_9 : f32 to vector<16x128xf32>
    %12 = arith.maximumf %6, %11 : vector<16x128xf32>
    %cst_10 = arith.constant 0.000000e+00 : f32
    %13 = vector.broadcast %cst_10 : f32 to vector<16x128xf32>
    %14 = arith.select %10, %8, %13 : vector<16x128xi1>, vector<16x128xf32>
    %c0_11 = arith.constant 0 : index
    %c0_12 = arith.constant 0 : index
    %15 = vector.load %arg5[%c0_11, %c0_12] : memref<128x128xf32, #tpu.memory_space<vmem>>, vector<128x128xf32>
    %c0_13 = arith.constant 0 : index
    %c0_14 = arith.constant 0 : index
    %16 = vector.load %arg6[%c0_13, %c0_14] : memref<256x128xf32, #tpu.memory_space<vmem>>, vector<256x128xf32>
    %c0_15 = arith.constant 0 : index
    %c0_16 = arith.constant 0 : index
    %17 = vector.load %arg7[%c0_15, %c0_16] : memref<1x128xf32, #tpu.memory_space<vmem>>, vector<1x128xf32>
    %cst_17 = arith.constant dense<0.000000e+00> : vector<16x128xf32>
    %18 = tpu.matmul %12, %15, %cst_17 {dimension_numbers = #tpu.dot_dimension_numbers<[1], [0], [0], [1], [0, 0, 1, 1], [], []>} : vector<16x128xf32>, vector<128x128xf32>, vector<16x128xf32> -> vector<16x128xf32>
    %19 = vector.broadcast %17 : vector<1x128xf32> to vector<16x128xf32>
    %20 = arith.addf %18, %19 : vector<16x128xf32>
    %21 = arith.mulf %12, %12 : vector<16x128xf32>
    %22 = arith.addf %21, %14 : vector<16x128xf32>
    %23 = tpu.concatenate %22, %14 in 1 : vector<16x128xf32>, vector<16x128xf32> -> vector<16x256xf32>
    %cst_18 = arith.constant dense<0.000000e+00> : vector<16x128xf32>
    %24 = tpu.matmul %23, %16, %cst_18 {dimension_numbers = #tpu.dot_dimension_numbers<[1], [0], [0], [1], [0, 0, 1, 1], [], []>} : vector<16x256xf32>, vector<256x128xf32>, vector<16x128xf32> -> vector<16x128xf32>
    %cst_19 = arith.constant 0.000000e+00 : f32
    %25 = vector.broadcast %cst_19 : f32 to vector<16x128xf32>
    %26 = arith.cmpf ogt, %20, %25 : vector<16x128xf32>
    %cst_20 = arith.constant 0.000000e+00 : f32
    %27 = vector.broadcast %cst_20 : f32 to vector<16x128xf32>
    %28 = arith.maximumf %20, %27 : vector<16x128xf32>
    %cst_21 = arith.constant 0.000000e+00 : f32
    %29 = vector.broadcast %cst_21 : f32 to vector<16x128xf32>
    %30 = arith.select %26, %24, %29 : vector<16x128xi1>, vector<16x128xf32>
    %c0_22 = arith.constant 0 : index
    %c0_23 = arith.constant 0 : index
    %31 = vector.load %arg8[%c0_22, %c0_23] : memref<128x128xf32, #tpu.memory_space<vmem>>, vector<128x128xf32>
    %c0_24 = arith.constant 0 : index
    %c0_25 = arith.constant 0 : index
    %32 = vector.load %arg9[%c0_24, %c0_25] : memref<256x128xf32, #tpu.memory_space<vmem>>, vector<256x128xf32>
    %c0_26 = arith.constant 0 : index
    %c0_27 = arith.constant 0 : index
    %33 = vector.load %arg10[%c0_26, %c0_27] : memref<1x128xf32, #tpu.memory_space<vmem>>, vector<1x128xf32>
    %cst_28 = arith.constant dense<0.000000e+00> : vector<16x128xf32>
    %34 = tpu.matmul %28, %31, %cst_28 {dimension_numbers = #tpu.dot_dimension_numbers<[1], [0], [0], [1], [0, 0, 1, 1], [], []>} : vector<16x128xf32>, vector<128x128xf32>, vector<16x128xf32> -> vector<16x128xf32>
    %35 = vector.broadcast %33 : vector<1x128xf32> to vector<16x128xf32>
    %36 = arith.addf %34, %35 : vector<16x128xf32>
    %37 = arith.mulf %28, %28 : vector<16x128xf32>
    %38 = arith.addf %37, %30 : vector<16x128xf32>
    %39 = tpu.concatenate %38, %30 in 1 : vector<16x128xf32>, vector<16x128xf32> -> vector<16x256xf32>
    %cst_29 = arith.constant dense<0.000000e+00> : vector<16x128xf32>
    %40 = tpu.matmul %39, %32, %cst_29 {dimension_numbers = #tpu.dot_dimension_numbers<[1], [0], [0], [1], [0, 0, 1, 1], [], []>} : vector<16x256xf32>, vector<256x128xf32>, vector<16x128xf32> -> vector<16x128xf32>
    %c0_30 = arith.constant 0 : index
    %c0_31 = arith.constant 0 : index
    %41 = vector.load %arg11[%c0_30, %c0_31] : memref<16x128xf32, #tpu.memory_space<vmem>>, vector<16x128xf32>
    tpu.vector_store %arg11[%c0_30, %c0_31], %36 {strides = array<i32>} : memref<16x128xf32, #tpu.memory_space<vmem>>, vector<16x128xf32>,
    %c0_32 = arith.constant 0 : index
    %c0_33 = arith.constant 0 : index
    %42 = vector.load %arg12[%c0_32, %c0_33] : memref<16x128xf32, #tpu.memory_space<vmem>>, vector<16x128xf32>
    tpu.vector_store %arg12[%c0_32, %c0_33], %40 {strides = array<i32>} : memref<16x128xf32, #tpu.memory_space<vmem>>, vector<16x128xf32>,
    return
  }
  func.func @transform_0(%arg0: i32) -> (i32, i32) {
    %c0_i32 = arith.constant 0 : i32
    %c0_i32_0 = arith.constant 0 : i32
    return %arg0, %c0_i32 : i32, i32
  }
  func.func @transform_1(%arg0: i32) -> (i32, i32) {
    %c0_i32 = arith.constant 0 : i32
    %c0_i32_0 = arith.constant 0 : i32
    %c0_i32_1 = arith.constant 0 : i32
    return %c0_i32, %c0_i32_0 : i32, i32
  }
  func.func @transform_2(%arg0: i32) -> (i32, i32) {
    %c0_i32 = arith.constant 0 : i32
    %c0_i32_0 = arith.constant 0 : i32
    %c0_i32_1 = arith.constant 0 : i32
    return %c0_i32, %c0_i32_0 : i32, i32
  }
  func.func @transform_3(%arg0: i32) -> (i32, i32) {
    %c0_i32 = arith.constant 0 : i32
    %c0_i32_0 = arith.constant 0 : i32
    %c0_i32_1 = arith.constant 0 : i32
    return %c0_i32, %c0_i32_0 : i32, i32
  }
  func.func @transform_4(%arg0: i32) -> (i32, i32) {
    %c0_i32 = arith.constant 0 : i32
    %c0_i32_0 = arith.constant 0 : i32
    %c0_i32_1 = arith.constant 0 : i32
    return %c0_i32, %c0_i32_0 : i32, i32
  }
  func.func @transform_5(%arg0: i32) -> (i32, i32) {
    %c0_i32 = arith.constant 0 : i32
    %c0_i32_0 = arith.constant 0 : i32
    %c0_i32_1 = arith.constant 0 : i32
    return %c0_i32, %c0_i32_0 : i32, i32
  }
  func.func @transform_6(%arg0: i32) -> (i32, i32) {
    %c0_i32 = arith.constant 0 : i32
    %c0_i32_0 = arith.constant 0 : i32
    %c0_i32_1 = arith.constant 0 : i32
    return %c0_i32, %c0_i32_0 : i32, i32
  }
  func.func @transform_7(%arg0: i32) -> (i32, i32) {
    %c0_i32 = arith.constant 0 : i32
    %c0_i32_0 = arith.constant 0 : i32
    %c0_i32_1 = arith.constant 0 : i32
    return %c0_i32, %c0_i32_0 : i32, i32
  }
  func.func @transform_8(%arg0: i32) -> (i32, i32) {
    %c0_i32 = arith.constant 0 : i32
    %c0_i32_0 = arith.constant 0 : i32
    %c0_i32_1 = arith.constant 0 : i32
    return %c0_i32, %c0_i32_0 : i32, i32
  }
  func.func @transform_9(%arg0: i32) -> (i32, i32) {
    %c0_i32 = arith.constant 0 : i32
    %c0_i32_0 = arith.constant 0 : i32
    %c0_i32_1 = arith.constant 0 : i32
    return %c0_i32, %c0_i32_0 : i32, i32
  }
  func.func @transform_10(%arg0: i32) -> (i32, i32) {
    %c0_i32 = arith.constant 0 : i32
    %c0_i32_0 = arith.constant 0 : i32
    return %arg0, %c0_i32 : i32, i32
  }
  func.func @transform_11(%arg0: i32) -> (i32, i32) {
    %c0_i32 = arith.constant 0 : i32
    %c0_i32_0 = arith.constant 0 : i32
    return %arg0, %c0_i32 : i32, i32
  }
}

module attributes {stable_mosaic.version = 11 : i64} {
  func.func @kernel(%arg0: i32, %arg1: memref<16x128xf32, #tpu.memory_space<vmem>>, %arg2: memref<128x128xf32, #tpu.memory_space<vmem>>, %arg3: memref<128x128xf32, #tpu.memory_space<vmem>>, %arg4: memref<1x128xf32, #tpu.memory_space<vmem>>, %arg5: memref<128x128xf32, #tpu.memory_space<vmem>>, %arg6: memref<256x128xf32, #tpu.memory_space<vmem>>, %arg7: memref<1x128xf32, #tpu.memory_space<vmem>>, %arg8: memref<128x128xf32, #tpu.memory_space<vmem>>, %arg9: memref<256x128xf32, #tpu.memory_space<vmem>>, %arg10: memref<1x128xf32, #tpu.memory_space<vmem>>, %arg11: memref<16x128xf32, #tpu.memory_space<vmem>>, %arg12: memref<16x128xf32, #tpu.memory_space<vmem>>) attributes {dimension_semantics = [#tpu.dimension_semantics<parallel>], iteration_bounds = array<i64: 1>, scalar_prefetch = 0 : i64, scratch_operands = 0 : i64, tpu.core_type = #tpu.core_type<tc>, window_params = [{transform_indices = @transform_0, window_bounds = array<i64: 16, 128>}, {pipeline_mode = #tpu.pipeline_mode<synchronous>, transform_indices = @transform_1, window_bounds = array<i64: 128, 128>}, {pipeline_mode = #tpu.pipeline_mode<synchronous>, transform_indices = @transform_2, window_bounds = array<i64: 128, 128>}, {pipeline_mode = #tpu.pipeline_mode<synchronous>, transform_indices = @transform_3, window_bounds = array<i64: 1, 128>}, {pipeline_mode = #tpu.pipeline_mode<synchronous>, transform_indices = @transform_4, window_bounds = array<i64: 128, 128>}, {pipeline_mode = #tpu.pipeline_mode<synchronous>, transform_indices = @transform_5, window_bounds = array<i64: 256, 128>}, {pipeline_mode = #tpu.pipeline_mode<synchronous>, transform_indices = @transform_6, window_bounds = array<i64: 1, 128>}, {pipeline_mode = #tpu.pipeline_mode<synchronous>, transform_indices = @transform_7, window_bounds = array<i64: 128, 128>}, {pipeline_mode = #tpu.pipeline_mode<synchronous>, transform_indices = @transform_8, window_bounds = array<i64: 256, 128>}, {pipeline_mode = #tpu.pipeline_mode<synchronous>, transform_indices = @transform_9, window_bounds = array<i64: 1, 128>}, {transform_indices = @transform_10, window_bounds = array<i64: 16, 128>}, {transform_indices = @transform_11, window_bounds = array<i64: 16, 128>}]} {
    %c0 = arith.constant 0 : index
    %c0_0 = arith.constant 0 : index
    %0 = vector.load %arg1[%c0, %c0_0] : memref<16x128xf32, #tpu.memory_space<vmem>>, vector<16x128xf32>
    %c0_1 = arith.constant 0 : index
    %c0_2 = arith.constant 0 : index
    %1 = vector.load %arg2[%c0_1, %c0_2] : memref<128x128xf32, #tpu.memory_space<vmem>>, vector<128x128xf32>
    %c0_3 = arith.constant 0 : index
    %c0_4 = arith.constant 0 : index
    %2 = vector.load %arg3[%c0_3, %c0_4] : memref<128x128xf32, #tpu.memory_space<vmem>>, vector<128x128xf32>
    %c0_5 = arith.constant 0 : index
    %c0_6 = arith.constant 0 : index
    %3 = vector.load %arg4[%c0_5, %c0_6] : memref<1x128xf32, #tpu.memory_space<vmem>>, vector<1x128xf32>
    %cst = arith.constant dense<0.000000e+00> : vector<16x128xf32>
    %4 = tpu.matmul %0, %1, %cst {dimension_numbers = #tpu.dot_dimension_numbers<[1], [0], [0], [1], [0, 0, 1, 1], [], []>} : vector<16x128xf32>, vector<128x128xf32>, vector<16x128xf32> -> vector<16x128xf32>
    %5 = vector.broadcast %3 : vector<1x128xf32> to vector<16x128xf32>
    %6 = arith.addf %4, %5 : vector<16x128xf32>
    %7 = arith.mulf %0, %0 : vector<16x128xf32>
    %cst_7 = arith.constant dense<0.000000e+00> : vector<16x128xf32>
    %8 = tpu.matmul %7, %2, %cst_7 {dimension_numbers = #tpu.dot_dimension_numbers<[1], [0], [0], [1], [0, 0, 1, 1], [], []>} : vector<16x128xf32>, vector<128x128xf32>, vector<16x128xf32> -> vector<16x128xf32>
    %cst_8 = arith.constant 0.000000e+00 : f32
    %9 = vector.broadcast %cst_8 : f32 to vector<16x128xf32>
    %10 = arith.cmpf ogt, %6, %9 : vector<16x128xf32>
    %cst_9 = arith.constant 0.000000e+00 : f32
    %11 = vector.broadcast %cst_9 : f32 to vector<16x128xf32>
    %12 = arith.maximumf %6, %11 : vector<16x128xf32>
    %cst_10 = arith.constant 0.000000e+00 : f32
    %13 = vector.broadcast %cst_10 : f32 to vector<16x128xf32>
    %14 = arith.select %10, %8, %13 : vector<16x128xi1>, vector<16x128xf32>
    %c0_11 = arith.constant 0 : index
    %c0_12 = arith.constant 0 : index
    %15 = vector.load %arg5[%c0_11, %c0_12] : memref<128x128xf32, #tpu.memory_space<vmem>>, vector<128x128xf32>
    %c0_13 = arith.constant 0 : index
    %c0_14 = arith.constant 0 : index
    %16 = vector.load %arg6[%c0_13, %c0_14] : memref<256x128xf32, #tpu.memory_space<vmem>>, vector<256x128xf32>
    %c0_15 = arith.constant 0 : index
    %c0_16 = arith.constant 0 : index
    %17 = vector.load %arg7[%c0_15, %c0_16] : memref<1x128xf32, #tpu.memory_space<vmem>>, vector<1x128xf32>
    %cst_17 = arith.constant dense<0.000000e+00> : vector<16x128xf32>
    %18 = tpu.matmul %12, %15, %cst_17 {dimension_numbers = #tpu.dot_dimension_numbers<[1], [0], [0], [1], [0, 0, 1, 1], [], []>} : vector<16x128xf32>, vector<128x128xf32>, vector<16x128xf32> -> vector<16x128xf32>
    %19 = vector.broadcast %17 : vector<1x128xf32> to vector<16x128xf32>
    %20 = arith.addf %18, %19 : vector<16x128xf32>
    %21 = arith.mulf %12, %12 : vector<16x128xf32>
    %22 = arith.addf %21, %14 : vector<16x128xf32>
    %23 = tpu.concatenate %22, %14 in 1 : vector<16x128xf32>, vector<16x128xf32> -> vector<16x256xf32>
    %cst_18 = arith.constant dense<0.000000e+00> : vector<16x128xf32>
    %24 = tpu.matmul %23, %16, %cst_18 {dimension_numbers = #tpu.dot_dimension_numbers<[1], [0], [0], [1], [0, 0, 1, 1], [], []>} : vector<16x256xf32>, vector<256x128xf32>, vector<16x128xf32> -> vector<16x128xf32>
    %cst_19 = arith.constant 0.000000e+00 : f32
    %25 = vector.broadcast %cst_19 : f32 to vector<16x128xf32>
    %26 = arith.cmpf ogt, %20, %25 : vector<16x128xf32>
    %cst_20 = arith.constant 0.000000e+00 : f32
    %27 = vector.broadcast %cst_20 : f32 to vector<16x128xf32>
    %28 = arith.maximumf %20, %27 : vector<16x128xf32>
    %cst_21 = arith.constant 0.000000e+00 : f32
    %29 = vector.broadcast %cst_21 : f32 to vector<16x128xf32>
    %30 = arith.select %26, %24, %29 : vector<16x128xi1>, vector<16x128xf32>
    %c0_22 = arith.constant 0 : index
    %c0_23 = arith.constant 0 : index
    %31 = vector.load %arg8[%c0_22, %c0_23] : memref<128x128xf32, #tpu.memory_space<vmem>>, vector<128x128xf32>
    %c0_24 = arith.constant 0 : index
    %c0_25 = arith.constant 0 : index
    %32 = vector.load %arg9[%c0_24, %c0_25] : memref<256x128xf32, #tpu.memory_space<vmem>>, vector<256x128xf32>
    %c0_26 = arith.constant 0 : index
    %c0_27 = arith.constant 0 : index
    %33 = vector.load %arg10[%c0_26, %c0_27] : memref<1x128xf32, #tpu.memory_space<vmem>>, vector<1x128xf32>
    %cst_28 = arith.constant dense<0.000000e+00> : vector<16x128xf32>
    %34 = tpu.matmul %28, %31, %cst_28 {dimension_numbers = #tpu.dot_dimension_numbers<[1], [0], [0], [1], [0, 0, 1, 1], [], []>} : vector<16x128xf32>, vector<128x128xf32>, vector<16x128xf32> -> vector<16x128xf32>
    %35 = vector.broadcast %33 : vector<1x128xf32> to vector<16x128xf32>
    %36 = arith.addf %34, %35 : vector<16x128xf32>
    %37 = arith.mulf %28, %28 : vector<16x128xf32>
    %38 = arith.addf %37, %30 : vector<16x128xf32>
    %39 = tpu.concatenate %38, %30 in 1 : vector<16x128xf32>, vector<16x128xf32> -> vector<16x256xf32>
    %cst_29 = arith.constant dense<0.000000e+00> : vector<16x128xf32>
    %40 = tpu.matmul %39, %32, %cst_29 {dimension_numbers = #tpu.dot_dimension_numbers<[1], [0], [0], [1], [0, 0, 1, 1], [], []>} : vector<16x256xf32>, vector<256x128xf32>, vector<16x128xf32> -> vector<16x128xf32>
    %c0_30 = arith.constant 0 : index
    %c0_31 = arith.constant 0 : index
    %41 = vector.load %arg11[%c0_30, %c0_31] : memref<16x128xf32, #tpu.memory_space<vmem>>, vector<16x128xf32>
    tpu.vector_store %arg11[%c0_30, %c0_31], %36 {strides = array<i32>} : memref<16x128xf32, #tpu.memory_space<vmem>>, vector<16x128xf32>,
    %c0_32 = arith.constant 0 : index
    %c0_33 = arith.constant 0 : index
    %42 = vector.load %arg12[%c0_32, %c0_33] : memref<16x128xf32, #tpu.memory_space<vmem>>, vector<16x128xf32>
    tpu.vector_store %arg12[%c0_32, %c0_33], %40 {strides = array<i32>} : memref<16x128xf32, #tpu.memory_space<vmem>>, vector<16x128xf32>,
    return
  }
  func.func @transform_0(%arg0: i32) -> (i32, i32) {
    %c0_i32 = arith.constant 0 : i32
    %c0_i32_0 = arith.constant 0 : i32
    return %arg0, %c0_i32 : i32, i32
  }
  func.func @transform_1(%arg0: i32) -> (i32, i32) {
    %c0_i32 = arith.constant 0 : i32
    %c0_i32_0 = arith.constant 0 : i32
    %c0_i32_1 = arith.constant 0 : i32
    return %c0_i32, %c0_i32_0 : i32, i32
  }
  func.func @transform_2(%arg0: i32) -> (i32, i32) {
    %c0_i32 = arith.constant 0 : i32
    %c0_i32_0 = arith.constant 0 : i32
    %c0_i32_1 = arith.constant 0 : i32
    return %c0_i32, %c0_i32_0 : i32, i32
  }
  func.func @transform_3(%arg0: i32) -> (i32, i32) {
    %c0_i32 = arith.constant 0 : i32
    %c0_i32_0 = arith.constant 0 : i32
    %c0_i32_1 = arith.constant 0 : i32
    return %c0_i32, %c0_i32_0 : i32, i32
  }
  func.func @transform_4(%arg0: i32) -> (i32, i32) {
    %c0_i32 = arith.constant 0 : i32
    %c0_i32_0 = arith.constant 0 : i32
    %c0_i32_1 = arith.constant 0 : i32
    return %c0_i32, %c0_i32_0 : i32, i32
  }
  func.func @transform_5(%arg0: i32) -> (i32, i32) {
    %c0_i32 = arith.constant 0 : i32
    %c0_i32_0 = arith.constant 0 : i32
    %c0_i32_1 = arith.constant 0 : i32
    return %c0_i32, %c0_i32_0 : i32, i32
  }
  func.func @transform_6(%arg0: i32) -> (i32, i32) {
    %c0_i32 = arith.constant 0 : i32
    %c0_i32_0 = arith.constant 0 : i32
    %c0_i32_1 = arith.constant 0 : i32
    return %c0_i32, %c0_i32_0 : i32, i32
  }
  func.func @transform_7(%arg0: i32) -> (i32, i32) {
    %c0_i32 = arith.constant 0 : i32
    %c0_i32_0 = arith.constant 0 : i32
    %c0_i32_1 = arith.constant 0 : i32
    return %c0_i32, %c0_i32_0 : i32, i32
  }
  func.func @transform_8(%arg0: i32) -> (i32, i32) {
    %c0_i32 = arith.constant 0 : i32
    %c0_i32_0 = arith.constant 0 : i32
    %c0_i32_1 = arith.constant 0 : i32
    return %c0_i32, %c0_i32_0 : i32, i32
  }
  func.func @transform_9(%arg0: i32) -> (i32, i32) {
    %c0_i32 = arith.constant 0 : i32
    %c0_i32_0 = arith.constant 0 : i32
    %c0_i32_1 = arith.constant 0 : i32
    return %c0_i32, %c0_i32_0 : i32, i32
  }
  func.func @transform_10(%arg0: i32) -> (i32, i32) {
    %c0_i32 = arith.constant 0 : i32
    %c0_i32_0 = arith.constant 0 : i32
    return %arg0, %c0_i32 : i32, i32
  }
  func.func @transform_11(%arg0: i32) -> (i32, i32) {
    %c0_i32 = arith.constant 0 : i32
    %c0_i32_0 = arith.constant 0 : i32
    return %arg0, %c0_i32 : i32, i32
  }
}

</mosaic_0001>

<llo_original>
// kernel: tpu_custom_call.1
$region0: #{tpu_custom_call.1}
  #allocation0 [shape = 'u32[]', space=smem, size = 0x4, offset = 0x4, fixed_abs, tag = 'smem constant byte address 0x4 - core index']
  #allocation1 [shape = 'u32[144,128]{1,0:T(1,128)}', space=vmem, size = 0x12000, scoped, tag = 'internal scratch']
  %s0 = inlined_call_operand.hbm [shape: f32[16,128], index: 0, kind: input, shape index: {}]
  %s1 = inlined_call_operand.hbm [shape: f32[128,128], index: 1, kind: input, shape index: {}]
  %s2 = inlined_call_operand.hbm [shape: f32[128,128], index: 2, kind: input, shape index: {}]
  %s3 = inlined_call_operand.hbm [shape: f32[1,128], index: 3, kind: input, shape index: {}]
  %s4 = inlined_call_operand.hbm [shape: f32[128,128], index: 4, kind: input, shape index: {}]
  %s5 = inlined_call_operand.hbm [shape: f32[256,128], index: 5, kind: input, shape index: {}]
  %s6 = inlined_call_operand.hbm [shape: f32[1,128], index: 6, kind: input, shape index: {}]
  %s7 = inlined_call_operand.hbm [shape: f32[128,128], index: 7, kind: input, shape index: {}]
  %s8 = inlined_call_operand.hbm [shape: f32[256,128], index: 8, kind: input, shape index: {}]
  %s9 = inlined_call_operand.hbm [shape: f32[1,128], index: 9, kind: input, shape index: {}]
  %s10 = inlined_call_operand.hbm [shape: f32[16,128], index: 10, kind: output, shape index: {0}]
  %s11 = inlined_call_operand.hbm [shape: f32[16,128], index: 11, kind: output, shape index: {1}]
  %12 = xla_tuple %s10, %s11
  %s13 = sld [smem:[#allocation0]]
  $region98: #{tpu_custom_call.1} parent=0
    _
  %s15 = ssub.s32 1, %s13
  %s16 = scalar_select 0, %s15, %s13
  $region1: #{tpu_custom_call.1} parent=0
    #allocation2 [shape = 'u8[8192]{0}', space=vmem, size = 0x2000, scoped, tag = 'input window, operand 0, single buffered']
    #allocation3 [shape = 's32[1]{0}', space=sflag, size = 0x4, scoped, tag = 'scoped memory for tpu_custom_call.1']
    #allocation4 [shape = 's32[1]{0}', space=sflag, size = 0x4, scoped, tag = 'scoped memory for tpu_custom_call.1']
    #allocation5 [shape = 'u8[65536]{0}', space=vmem, size = 0x10000, scoped, tag = 'input window, operand 1, single buffered']
    #allocation6 [shape = 's32[1]{0}', space=sflag, size = 0x4, scoped, tag = 'scoped memory for tpu_custom_call.1']
    #allocation7 [shape = 'u8[65536]{0}', space=vmem, size = 0x10000, scoped, tag = 'input window, operand 2, single buffered']
    #allocation8 [shape = 'u8[512]{0}', space=vmem, size = 0x400, scoped, tag = 'input window, operand 3, single buffered']
    #allocation9 [shape = 's32[1]{0}', space=sflag, size = 0x4, scoped, tag = 'scoped memory for tpu_custom_call.1']
    #allocation10 [shape = 'u8[65536]{0}', space=vmem, size = 0x10000, scoped, tag = 'input window, operand 4, single buffered']
    #allocation11 [shape = 'u8[131072]{0}', space=vmem, size = 0x20000, scoped, tag = 'input window, operand 5, single buffered']
    #allocation12 [shape = 's32[1]{0}', space=sflag, size = 0x4, scoped, tag = 'scoped memory for tpu_custom_call.1']
    #allocation13 [shape = 'u8[512]{0}', space=vmem, size = 0x400, scoped, tag = 'input window, operand 6, single buffered']
    #allocation14 [shape = 'u8[65536]{0}', space=vmem, size = 0x10000, scoped, tag = 'input window, operand 7, single buffered']
    #allocation15 [shape = 's32[1]{0}', space=sflag, size = 0x4, scoped, tag = 'scoped memory for tpu_custom_call.1']
    #allocation16 [shape = 'u8[131072]{0}', space=vmem, size = 0x20000, scoped, tag = 'input window, operand 8, single buffered']
    #allocation17 [shape = 'u8[512]{0}', space=vmem, size = 0x400, scoped, tag = 'input window, operand 9, single buffered']
    #allocation18 [shape = 's32[1]{0}', space=sflag, size = 0x4, scoped, tag = 'scoped memory for tpu_custom_call.1']
    #allocation19 [shape = 'u8[8192]{0}', space=vmem, size = 0x2000, scoped, tag = 'output window, operand 0, single buffered']
    #allocation20 [shape = 'u8[8192]{0}', space=vmem, size = 0x2000, scoped, tag = 'output window, operand 1, single buffered']
    #allocation21 [shape = 's32[1]{0}', space=sflag, size = 0x4, scoped, tag = 'scoped memory for tpu_custom_call.1']
    %17 = vsyncpa [#allocation3], 0
    %18 = vsyncpa [#allocation6], 0
    %19 = vsyncpa [#allocation9], 0
    %20 = vsyncpa [#allocation12], 0
    %21 = vsyncpa [#allocation15], 0
    %22 = vsyncpa [#allocation18], 0
    %23 = vsyncpa [#allocation4], 0
    %24 = vsyncpa [#allocation21], 0
    // Predicated region
    $region2: #{tpu_custom_call.1} parent=1 // pred_check
      _
    $region3: #{tpu_custom_call.1} parent=1 // pred_check_branch
      %26 = sbr.rel (0) target = $region5
    $region4: #{tpu_custom_call.1} parent=1 // pred_region
      %s28 = ssub.s32 256, 256
      %29 = vsyncadd [#allocation3], %s28
      %s30 = sshll.u32 [#allocation2], 4
      %s31 = int_to_ptr.vmem [resolvable:$true] %s30
      %36 = dma.hbm_to_vmem [thread:$0]  %s0, 256, %s31, [#allocation3], 128, 128, 8
    $region5: #{tpu_custom_call.1} parent=1 // pred_fallthru
      _
    // Predicated region
    $region6: #{tpu_custom_call.1} parent=1 // pred_check
      _
    $region7: #{tpu_custom_call.1} parent=1 // pred_check_branch
      %38 = sbr.rel (0) target = $region9
    $region8: #{tpu_custom_call.1} parent=1 // pred_region
      %s40 = ssub.s32 2048, 2048
      %41 = vsyncadd [#allocation6], %s40
      %s42 = sshll.u32 [#allocation5], 4
      %s43 = int_to_ptr.vmem [resolvable:$true] %s42
      %48 = dma.hbm_to_vmem [thread:$0]  %s1, 2048, %s43, [#allocation6], 128, 128, 8
    $region9: #{tpu_custom_call.1} parent=1 // pred_fallthru
      _
    // Predicated region
    $region10: #{tpu_custom_call.1} parent=1 // pred_check
      _
    $region11: #{tpu_custom_call.1} parent=1 // pred_check_branch
      %50 = sbr.rel (0) target = $region13
    $region12: #{tpu_custom_call.1} parent=1 // pred_region
      %s52 = ssub.s32 2048, 2048
      %53 = vsyncadd [#allocation6], %s52
      %s54 = sshll.u32 [#allocation7], 4
      %s55 = int_to_ptr.vmem [resolvable:$true] %s54
      %60 = dma.hbm_to_vmem [thread:$0]  %s2, 2048, %s55, [#allocation6], 128, 128, 8
    $region13: #{tpu_custom_call.1} parent=1 // pred_fallthru
      _
    // Predicated region
    $region14: #{tpu_custom_call.1} parent=1 // pred_check
      _
    $region15: #{tpu_custom_call.1} parent=1 // pred_check_branch
      %62 = sbr.rel (0) target = $region17
    $region16: #{tpu_custom_call.1} parent=1 // pred_region
      %s64 = ssub.s32 16, 16
      %65 = vsyncadd [#allocation9], %s64
      %s67 = sshll.u32 [#allocation8], 4
      %s68 = int_to_ptr.vmem [resolvable:$true] %s67
      %70 = dma.hbm_to_vmem [thread:$0]  %s3, 16, %s68, [#allocation9]
    $region17: #{tpu_custom_call.1} parent=1 // pred_fallthru
      _
    // Predicated region
    $region18: #{tpu_custom_call.1} parent=1 // pred_check
      _
    $region19: #{tpu_custom_call.1} parent=1 // pred_check_branch
      %72 = sbr.rel (0) target = $region21
    $region20: #{tpu_custom_call.1} parent=1 // pred_region
      %s74 = ssub.s32 2048, 2048
      %75 = vsyncadd [#allocation9], %s74
      %s76 = sshll.u32 [#allocation10], 4
      %s77 = int_to_ptr.vmem [resolvable:$true] %s76
      %82 = dma.hbm_to_vmem [thread:$0]  %s4, 2048, %s77, [#allocation9], 128, 128, 8
    $region21: #{tpu_custom_call.1} parent=1 // pred_fallthru
      _
    // Predicated region
    $region22: #{tpu_custom_call.1} parent=1 // pred_check
      _
    $region23: #{tpu_custom_call.1} parent=1 // pred_check_branch
      %84 = sbr.rel (0) target = $region25
    $region24: #{tpu_custom_call.1} parent=1 // pred_region
      %s86 = ssub.s32 4096, 4096
      %87 = vsyncadd [#allocation12], %s86
      %s88 = sshll.u32 [#allocation11], 4
      %s89 = int_to_ptr.vmem [resolvable:$true] %s88
      %94 = dma.hbm_to_vmem [thread:$0]  %s5, 4096, %s89, [#allocation12], 128, 128, 8
    $region25: #{tpu_custom_call.1} parent=1 // pred_fallthru
      _
    // Predicated region
    $region26: #{tpu_custom_call.1} parent=1 // pred_check
      _
    $region27: #{tpu_custom_call.1} parent=1 // pred_check_branch
      %96 = sbr.rel (0) target = $region29
    $region28: #{tpu_custom_call.1} parent=1 // pred_region
      %s98 = ssub.s32 16, 16
      %99 = vsyncadd [#allocation12], %s98
      %s101 = sshll.u32 [#allocation13], 4
      %s102 = int_to_ptr.vmem [resolvable:$true] %s101
      %104 = dma.hbm_to_vmem [thread:$0]  %s6, 16, %s102, [#allocation12]
    $region29: #{tpu_custom_call.1} parent=1 // pred_fallthru
      _
    // Predicated region
    $region30: #{tpu_custom_call.1} parent=1 // pred_check
      _
    $region31: #{tpu_custom_call.1} parent=1 // pred_check_branch
      %106 = sbr.rel (0) target = $region33
    $region32: #{tpu_custom_call.1} parent=1 // pred_region
      %s108 = ssub.s32 2048, 2048
      %109 = vsyncadd [#allocation15], %s108
      %s110 = sshll.u32 [#allocation14], 4
      %s111 = int_to_ptr.vmem [resolvable:$true] %s110
      %116 = dma.hbm_to_vmem [thread:$0]  %s7, 2048, %s111, [#allocation15], 128, 128, 8
    $region33: #{tpu_custom_call.1} parent=1 // pred_fallthru
      _
    // Predicated region
    $region34: #{tpu_custom_call.1} parent=1 // pred_check
      _
    $region35: #{tpu_custom_call.1} parent=1 // pred_check_branch
      %118 = sbr.rel (0) target = $region37
    $region36: #{tpu_custom_call.1} parent=1 // pred_region
      %s120 = ssub.s32 4096, 4096
      %121 = vsyncadd [#allocation15], %s120
      %s122 = sshll.u32 [#allocation16], 4
      %s123 = int_to_ptr.vmem [resolvable:$true] %s122
      %128 = dma.hbm_to_vmem [thread:$0]  %s8, 4096, %s123, [#allocation15], 128, 128, 8
    $region37: #{tpu_custom_call.1} parent=1 // pred_fallthru
      _
    // Predicated region
    $region38: #{tpu_custom_call.1} parent=1 // pred_check
      _
    $region39: #{tpu_custom_call.1} parent=1 // pred_check_branch
      %130 = sbr.rel (0) target = $region41
    $region40: #{tpu_custom_call.1} parent=1 // pred_region
      %s132 = ssub.s32 16, 16
      %133 = vsyncadd [#allocation18], %s132
      %s135 = sshll.u32 [#allocation17], 4
      %s136 = int_to_ptr.vmem [resolvable:$true] %s135
      %138 = dma.hbm_to_vmem [thread:$0]  %s9, 16, %s136, [#allocation18]
    $region41: #{tpu_custom_call.1} parent=1 // pred_fallthru
      _
    // Predicated region
    $region42: #{tpu_custom_call.1} parent=1 // pred_check
      _
    $region43: #{tpu_custom_call.1} parent=1 // pred_check_branch
      %140 = sbr.rel (0) target = $region45
    $region44: #{tpu_custom_call.1} parent=1 // pred_region
      %141 = dma.done [#allocation3], 256
    $region45: #{tpu_custom_call.1} parent=1 // pred_fallthru
      _
    // Predicated region
    $region46: #{tpu_custom_call.1} parent=1 // pred_check
      _
    $region47: #{tpu_custom_call.1} parent=1 // pred_check_branch
      %143 = sbr.rel (0) target = $region49
    $region48: #{tpu_custom_call.1} parent=1 // pred_region
      %144 = dma.done [#allocation6], 2048
    $region49: #{tpu_custom_call.1} parent=1 // pred_fallthru
      _
    // Predicated region
    $region50: #{tpu_custom_call.1} parent=1 // pred_check
      _
    $region51: #{tpu_custom_call.1} parent=1 // pred_check_branch
      %146 = sbr.rel (0) target = $region53
    $region52: #{tpu_custom_call.1} parent=1 // pred_region
      %147 = dma.done [#allocation6], 2048
    $region53: #{tpu_custom_call.1} parent=1 // pred_fallthru
      _
    // Predicated region
    $region54: #{tpu_custom_call.1} parent=1 // pred_check
      _
    $region55: #{tpu_custom_call.1} parent=1 // pred_check_branch
      %149 = sbr.rel (0) target = $region57
    $region56: #{tpu_custom_call.1} parent=1 // pred_region
      %150 = dma.done [#allocation9], 16
    $region57: #{tpu_custom_call.1} parent=1 // pred_fallthru
      _
    // Predicated region
    $region58: #{tpu_custom_call.1} parent=1 // pred_check
      _
    $region59: #{tpu_custom_call.1} parent=1 // pred_check_branch
      %152 = sbr.rel (0) target = $region61
    $region60: #{tpu_custom_call.1} parent=1 // pred_region
      %153 = dma.done [#allocation9], 2048
    $region61: #{tpu_custom_call.1} parent=1 // pred_fallthru
      _
    // Predicated region
    $region62: #{tpu_custom_call.1} parent=1 // pred_check
      _
    $region63: #{tpu_custom_call.1} parent=1 // pred_check_branch
      %155 = sbr.rel (0) target = $region65
    $region64: #{tpu_custom_call.1} parent=1 // pred_region
      %156 = dma.done [#allocation12], 4096
    $region65: #{tpu_custom_call.1} parent=1 // pred_fallthru
      _
    // Predicated region
    $region66: #{tpu_custom_call.1} parent=1 // pred_check
      _
    $region67: #{tpu_custom_call.1} parent=1 // pred_check_branch
      %158 = sbr.rel (0) target = $region69
    $region68: #{tpu_custom_call.1} parent=1 // pred_region
      %159 = dma.done [#allocation12], 16
    $region69: #{tpu_custom_call.1} parent=1 // pred_fallthru
      _
    // Predicated region
    $region70: #{tpu_custom_call.1} parent=1 // pred_check
      _
    $region71: #{tpu_custom_call.1} parent=1 // pred_check_branch
      %161 = sbr.rel (0) target = $region73
    $region72: #{tpu_custom_call.1} parent=1 // pred_region
      %162 = dma.done [#allocation15], 2048
    $region73: #{tpu_custom_call.1} parent=1 // pred_fallthru
      _
    // Predicated region
    $region74: #{tpu_custom_call.1} parent=1 // pred_check
      _
    $region75: #{tpu_custom_call.1} parent=1 // pred_check_branch
      %164 = sbr.rel (0) target = $region77
    $region76: #{tpu_custom_call.1} parent=1 // pred_region
      %165 = dma.done [#allocation15], 4096
    $region77: #{tpu_custom_call.1} parent=1 // pred_fallthru
      _
    // Predicated region
    $region78: #{tpu_custom_call.1} parent=1 // pred_check
      _
    $region79: #{tpu_custom_call.1} parent=1 // pred_check_branch
      %167 = sbr.rel (0) target = $region81
    $region80: #{tpu_custom_call.1} parent=1 // pred_region
      %168 = dma.done [#allocation18], 16
    $region81: #{tpu_custom_call.1} parent=1 // pred_fallthru
      _
    %v169 = vld [vmem:[#allocation2] sm:$0xff]
    %v170 = vld [vmem:[#allocation2 + $0x8] sm:$0xff]
    %v171 = vld [vmem:[#allocation5] sm:$0xff]
    %v172 = vld [vmem:[#allocation5 + $0x8] sm:$0xff]
    %v173 = vld [vmem:[#allocation5 + $0x10] sm:$0xff]
    %v174 = vld [vmem:[#allocation5 + $0x18] sm:$0xff]
    %v175 = vld [vmem:[#allocation5 + $0x20] sm:$0xff]
    %v176 = vld [vmem:[#allocation5 + $0x28] sm:$0xff]
    %v177 = vld [vmem:[#allocation5 + $0x30] sm:$0xff]
    %v178 = vld [vmem:[#allocation5 + $0x38] sm:$0xff]
    %v179 = vld [vmem:[#allocation5 + $0x40] sm:$0xff]
    %v180 = vld [vmem:[#allocation5 + $0x48] sm:$0xff]
    %v181 = vld [vmem:[#allocation5 + $0x50] sm:$0xff]
    %v182 = vld [vmem:[#allocation5 + $0x58] sm:$0xff]
    %v183 = vld [vmem:[#allocation5 + $0x60] sm:$0xff]
    %v184 = vld [vmem:[#allocation5 + $0x68] sm:$0xff]
    %v185 = vld [vmem:[#allocation5 + $0x70] sm:$0xff]
    %v186 = vld [vmem:[#allocation5 + $0x78] sm:$0xff]
    %v187 = vld [vmem:[#allocation7] sm:$0xff]
    %v188 = vld [vmem:[#allocation7 + $0x8] sm:$0xff]
    %v189 = vld [vmem:[#allocation7 + $0x10] sm:$0xff]
    %v190 = vld [vmem:[#allocation7 + $0x18] sm:$0xff]
    %v191 = vld [vmem:[#allocation7 + $0x20] sm:$0xff]
    %v192 = vld [vmem:[#allocation7 + $0x28] sm:$0xff]
    %v193 = vld [vmem:[#allocation7 + $0x30] sm:$0xff]
    %v194 = vld [vmem:[#allocation7 + $0x38] sm:$0xff]
    %v195 = vld [vmem:[#allocation7 + $0x40] sm:$0xff]
    %v196 = vld [vmem:[#allocation7 + $0x48] sm:$0xff]
    %v197 = vld [vmem:[#allocation7 + $0x50] sm:$0xff]
    %v198 = vld [vmem:[#allocation7 + $0x58] sm:$0xff]
    %v199 = vld [vmem:[#allocation7 + $0x60] sm:$0xff]
    %v200 = vld [vmem:[#allocation7 + $0x68] sm:$0xff]
    %v201 = vld [vmem:[#allocation7 + $0x70] sm:$0xff]
    %v202 = vld [vmem:[#allocation7 + $0x78] sm:$0xff]
    %v203 = vld [vmem:[#allocation8] sm:$0x1]
    %v205 = vlaneseq
    %v206 = vshrl.u32 %v205, 7
    %v207 = vsub.s32 0, %v206
    %v208 = vrot.slane %v203, %v207
    %210 = vmatprep.subr.mxu0 0.0
    %211 = vmatpush1.msra.mxu0 %v171
    %212 = vmatprep.subr.mxu0 0.0
    %213 = vmatpush1.msra.mxu0 %v172
    %214 = vmatprep.subr.mxu0 0.0
    %215 = vmatpush1.msra.mxu0 %v173
    %216 = vmatprep.subr.mxu0 0.0
    %217 = vmatpush1.msra.mxu0 %v174
    %218 = vmatprep.subr.mxu0 0.0
    %219 = vmatpush1.msra.mxu0 %v175
    %220 = vmatprep.subr.mxu0 0.0
    %221 = vmatpush1.msra.mxu0 %v176
    %222 = vmatprep.subr.mxu0 0.0
    %223 = vmatpush1.msra.mxu0 %v177
    %224 = vmatprep.subr.mxu0 0.0
    %225 = vmatpush1.msra.mxu0 %v178
    %226 = vmatprep.subr.mxu0 0.0
    %227 = vmatpush1.msra.mxu0 %v179
    %228 = vmatprep.subr.mxu0 0.0
    %229 = vmatpush1.msra.mxu0 %v180
    %230 = vmatprep.subr.mxu0 0.0
    %231 = vmatpush1.msra.mxu0 %v181
    %232 = vmatprep.subr.mxu0 0.0
    %233 = vmatpush1.msra.mxu0 %v182
    %234 = vmatprep.subr.mxu0 0.0
    %235 = vmatpush1.msra.mxu0 %v183
    %236 = vmatprep.subr.mxu0 0.0
    %237 = vmatpush1.msra.mxu0 %v184
    %238 = vmatprep.subr.mxu0 0.0
    %239 = vmatpush1.msra.mxu0 %v185
    %240 = vmatprep.subr.mxu0 0.0
    %241 = vmatpush1.msra.mxu0 %v186
    %242 = vmatprep.subr.mxu0 0.0
    %243 = vmatpush1.msra.mxu0 0.0
    %244 = vmatprep.subr.mxu0 0.0
    %245 = vmatpush1.msra.mxu0 0.0
    %246 = vmatprep.subr.mxu0 0.0
    %247 = vmatpush1.msra.mxu0 0.0
    %248 = vmatprep.subr.mxu0 0.0
    %249 = vmatpush1.msra.mxu0 0.0
    %250 = vmatprep.subr.mxu0 0.0
    %251 = vmatpush1.msra.mxu0 0.0
    %252 = vmatprep.subr.mxu0 0.0
    %253 = vmatpush1.msra.mxu0 0.0
    %254 = vmatprep.subr.mxu0 0.0
    %255 = vmatpush1.msra.mxu0 0.0
    %256 = vmatprep.subr.mxu0 0.0
    %257 = vmatpush1.msra.mxu0 0.0
    %258 = vmatprep.subr.mxu0 0.0
    %259 = vmatpush1.msra.mxu0 0.0
    %260 = vmatprep.subr.mxu0 0.0
    %261 = vmatpush1.msra.mxu0 0.0
    %262 = vmatprep.subr.mxu0 0.0
    %263 = vmatpush1.msra.mxu0 0.0
    %264 = vmatprep.subr.mxu0 0.0
    %265 = vmatpush1.msra.mxu0 0.0
    %266 = vmatprep.subr.mxu0 0.0
    %267 = vmatpush1.msra.mxu0 0.0
    %268 = vmatprep.subr.mxu0 0.0
    %269 = vmatpush1.msra.mxu0 0.0
    %270 = vmatprep.subr.mxu0 0.0
    %271 = vmatpush1.msra.mxu0 0.0
    %272 = vmatprep.subr.mxu0 0.0
    %273 = vmatpush1.msra.mxu0 0.0
    %274 = vmatprep.mubr.f32.mxu0 0.0
    %275 = vmatmul.mubr.f32.gmra.mrb[0].mxu0 %v169
    %v276 = vpop.f32.mrb[0].mxu0
    %v277 = vadd.f32 %v208, %v276
    %v278 = vpop.f32.mrb[0].mxu0
    %279 = vmatprep.mubr.f32.mxu0 0.0
    %280 = vmatmul.mubr.f32.gmra.mrb[0].mxu0 %v170
    %v281 = vpop.f32.mrb[0].mxu0
    %v282 = vadd.f32 %v208, %v281
    %v283 = vpop.f32.mrb[0].mxu0
    %284 = vdwg.mxu0
    %v285 = vmul.f32 %v169, %v169
    %v286 = vmul.f32 %v170, %v170
    %287 = vmatprep.subr.mxu0 0.0
    %288 = vmatpush1.msra.mxu0 %v187
    %289 = vmatprep.subr.mxu0 0.0
    %290 = vmatpush1.msra.mxu0 %v188
    %291 = vmatprep.subr.mxu0 0.0
    %292 = vmatpush1.msra.mxu0 %v189
    %293 = vmatprep.subr.mxu0 0.0
    %294 = vmatpush1.msra.mxu0 %v190
    %295 = vmatprep.subr.mxu0 0.0
    %296 = vmatpush1.msra.mxu0 %v191
    %297 = vmatprep.subr.mxu0 0.0
    %298 = vmatpush1.msra.mxu0 %v192
    %299 = vmatprep.subr.mxu0 0.0
    %300 = vmatpush1.msra.mxu0 %v193
    %301 = vmatprep.subr.mxu0 0.0
    %302 = vmatpush1.msra.mxu0 %v194
    %303 = vmatprep.subr.mxu0 0.0
    %304 = vmatpush1.msra.mxu0 %v195
    %305 = vmatprep.subr.mxu0 0.0
    %306 = vmatpush1.msra.mxu0 %v196
    %307 = vmatprep.subr.mxu0 0.0
    %308 = vmatpush1.msra.mxu0 %v197
    %309 = vmatprep.subr.mxu0 0.0
    %310 = vmatpush1.msra.mxu0 %v198
    %311 = vmatprep.subr.mxu0 0.0
    %312 = vmatpush1.msra.mxu0 %v199
    %313 = vmatprep.subr.mxu0 0.0
    %314 = vmatpush1.msra.mxu0 %v200
    %315 = vmatprep.subr.mxu0 0.0
    %316 = vmatpush1.msra.mxu0 %v201
    %317 = vmatprep.subr.mxu0 0.0
    %318 = vmatpush1.msra.mxu0 %v202
    %319 = vmatprep.subr.mxu0 0.0
    %320 = vmatpush1.msra.mxu0 0.0
    %321 = vmatprep.subr.mxu0 0.0
    %322 = vmatpush1.msra.mxu0 0.0
    %323 = vmatprep.subr.mxu0 0.0
    %324 = vmatpush1.msra.mxu0 0.0
    %325 = vmatprep.subr.mxu0 0.0
    %326 = vmatpush1.msra.mxu0 0.0
    %327 = vmatprep.subr.mxu0 0.0
    %328 = vmatpush1.msra.mxu0 0.0
    %329 = vmatprep.subr.mxu0 0.0
    %330 = vmatpush1.msra.mxu0 0.0
    %331 = vmatprep.subr.mxu0 0.0
    %332 = vmatpush1.msra.mxu0 0.0
    %333 = vmatprep.subr.mxu0 0.0
    %334 = vmatpush1.msra.mxu0 0.0
    %335 = vmatprep.subr.mxu0 0.0
    %336 = vmatpush1.msra.mxu0 0.0
    %337 = vmatprep.subr.mxu0 0.0
    %338 = vmatpush1.msra.mxu0 0.0
    %339 = vmatprep.subr.mxu0 0.0
    %340 = vmatpush1.msra.mxu0 0.0
    %341 = vmatprep.subr.mxu0 0.0
    %342 = vmatpush1.msra.mxu0 0.0
    %343 = vmatprep.subr.mxu0 0.0
    %344 = vmatpush1.msra.mxu0 0.0
    %345 = vmatprep.subr.mxu0 0.0
    %346 = vmatpush1.msra.mxu0 0.0
    %347 = vmatprep.subr.mxu0 0.0
    %348 = vmatpush1.msra.mxu0 0.0
    %349 = vmatprep.subr.mxu0 0.0
    %350 = vmatpush1.msra.mxu0 0.0
    %351 = vmatprep.mubr.f32.mxu0 0.0
    %352 = vmatmul.mubr.f32.gmra.mrb[0].mxu0 %v285
    %v353 = vpop.f32.mrb[0].mxu0
    %v354 = vadd.f32 0.0, %v353
    %v355 = vpop.f32.mrb[0].mxu0
    %356 = vmatprep.mubr.f32.mxu0 0.0
    %357 = vmatmul.mubr.f32.gmra.mrb[0].mxu0 %v286
    %v358 = vpop.f32.mrb[0].mxu0
    %v359 = vadd.f32 0.0, %v358
    %v360 = vpop.f32.mrb[0].mxu0
    %361 = vdwg.mxu0
    %vm362 = vcmp.gt.f32.partialorder %v277, 0.0
    %vm363 = vcmp.gt.f32.partialorder %v282, 0.0
    %v364 = vmax.f32 %v277, 0.0
    %v365 = vmax.f32 %v282, 0.0
    %v366 = vsel %vm362, %v354, 0.0
    %v367 = vsel %vm363, %v359, 0.0
    %v368 = vld [vmem:[#allocation10] sm:$0xff]
    %v369 = vld [vmem:[#allocation10 + $0x8] sm:$0xff]
    %v370 = vld [vmem:[#allocation10 + $0x10] sm:$0xff]
    %v371 = vld [vmem:[#allocation10 + $0x18] sm:$0xff]
    %v372 = vld [vmem:[#allocation10 + $0x20] sm:$0xff]
    %v373 = vld [vmem:[#allocation10 + $0x28] sm:$0xff]
    %v374 = vld [vmem:[#allocation10 + $0x30] sm:$0xff]
    %v375 = vld [vmem:[#allocation10 + $0x38] sm:$0xff]
    %v376 = vld [vmem:[#allocation10 + $0x40] sm:$0xff]
    %v377 = vld [vmem:[#allocation10 + $0x48] sm:$0xff]
    %v378 = vld [vmem:[#allocation10 + $0x50] sm:$0xff]
    %v379 = vld [vmem:[#allocation10 + $0x58] sm:$0xff]
    %v380 = vld [vmem:[#allocation10 + $0x60] sm:$0xff]
    %v381 = vld [vmem:[#allocation10 + $0x68] sm:$0xff]
    %v382 = vld [vmem:[#allocation10 + $0x70] sm:$0xff]
    %v383 = vld [vmem:[#allocation10 + $0x78] sm:$0xff]
    %v384 = vld [vmem:[#allocation11] sm:$0xff]
    %v385 = vld [vmem:[#allocation11 + $0x8] sm:$0xff]
    %v386 = vld [vmem:[#allocation11 + $0x10] sm:$0xff]
    %v387 = vld [vmem:[#allocation11 + $0x18] sm:$0xff]
    %v388 = vld [vmem:[#allocation11 + $0x20] sm:$0xff]
    %v389 = vld [vmem:[#allocation11 + $0x28] sm:$0xff]
    %v390 = vld [vmem:[#allocation11 + $0x30] sm:$0xff]
    %v391 = vld [vmem:[#allocation11 + $0x38] sm:$0xff]
    %v392 = vld [vmem:[#allocation11 + $0x40] sm:$0xff]
    %v393 = vld [vmem:[#allocation11 + $0x48] sm:$0xff]
    %v394 = vld [vmem:[#allocation11 + $0x50] sm:$0xff]
    %v395 = vld [vmem:[#allocation11 + $0x58] sm:$0xff]
    %v396 = vld [vmem:[#allocation11 + $0x60] sm:$0xff]
    %v397 = vld [vmem:[#allocation11 + $0x68] sm:$0xff]
    %v398 = vld [vmem:[#allocation11 + $0x70] sm:$0xff]
    %v399 = vld [vmem:[#allocation11 + $0x78] sm:$0xff]
    %v400 = vld [vmem:[#allocation11 + $0x80] sm:$0xff]
    %v401 = vld [vmem:[#allocation11 + $0x88] sm:$0xff]
    %v402 = vld [vmem:[#allocation11 + $0x90] sm:$0xff]
    %v403 = vld [vmem:[#allocation11 + $0x98] sm:$0xff]
    %v404 = vld [vmem:[#allocation11 + $0xa0] sm:$0xff]
    %v405 = vld [vmem:[#allocation11 + $0xa8] sm:$0xff]
    %v406 = vld [vmem:[#allocation11 + $0xb0] sm:$0xff]
    %v407 = vld [vmem:[#allocation11 + $0xb8] sm:$0xff]
    %v408 = vld [vmem:[#allocation11 + $0xc0] sm:$0xff]
    %v409 = vld [vmem:[#allocation11 + $0xc8] sm:$0xff]
    %v410 = vld [vmem:[#allocation11 + $0xd0] sm:$0xff]
    %v411 = vld [vmem:[#allocation11 + $0xd8] sm:$0xff]
    %v412 = vld [vmem:[#allocation11 + $0xe0] sm:$0xff]
    %v413 = vld [vmem:[#allocation11 + $0xe8] sm:$0xff]
    %v414 = vld [vmem:[#allocation11 + $0xf0] sm:$0xff]
    %v415 = vld [vmem:[#allocation11 + $0xf8] sm:$0xff]
    %v416 = vld [vmem:[#allocation13] sm:$0x1]
    %v418 = vlaneseq
    %v419 = vshrl.u32 %v418, 7
    %v420 = vsub.s32 0, %v419
    %v421 = vrot.slane %v416, %v420
    %423 = vmatprep.subr.mxu0 0.0
    %424 = vmatpush1.msra.mxu0 %v368
    %425 = vmatprep.subr.mxu0 0.0
    %426 = vmatpush1.msra.mxu0 %v369
    %427 = vmatprep.subr.mxu0 0.0
    %428 = vmatpush1.msra.mxu0 %v370
    %429 = vmatprep.subr.mxu0 0.0
    %430 = vmatpush1.msra.mxu0 %v371
    %431 = vmatprep.subr.mxu0 0.0
    %432 = vmatpush1.msra.mxu0 %v372
    %433 = vmatprep.subr.mxu0 0.0
    %434 = vmatpush1.msra.mxu0 %v373
    %435 = vmatprep.subr.mxu0 0.0
    %436 = vmatpush1.msra.mxu0 %v374
    %437 = vmatprep.subr.mxu0 0.0
    %438 = vmatpush1.msra.mxu0 %v375
    %439 = vmatprep.subr.mxu0 0.0
    %440 = vmatpush1.msra.mxu0 %v376
    %441 = vmatprep.subr.mxu0 0.0
    %442 = vmatpush1.msra.mxu0 %v377
    %443 = vmatprep.subr.mxu0 0.0
    %444 = vmatpush1.msra.mxu0 %v378
    %445 = vmatprep.subr.mxu0 0.0
    %446 = vmatpush1.msra.mxu0 %v379
    %447 = vmatprep.subr.mxu0 0.0
    %448 = vmatpush1.msra.mxu0 %v380
    %449 = vmatprep.subr.mxu0 0.0
    %450 = vmatpush1.msra.mxu0 %v381
    %451 = vmatprep.subr.mxu0 0.0
    %452 = vmatpush1.msra.mxu0 %v382
    %453 = vmatprep.subr.mxu0 0.0
    %454 = vmatpush1.msra.mxu0 %v383
    %455 = vmatprep.subr.mxu0 0.0
    %456 = vmatpush1.msra.mxu0 0.0
    %457 = vmatprep.subr.mxu0 0.0
    %458 = vmatpush1.msra.mxu0 0.0
    %459 = vmatprep.subr.mxu0 0.0
    %460 = vmatpush1.msra.mxu0 0.0
    %461 = vmatprep.subr.mxu0 0.0
    %462 = vmatpush1.msra.mxu0 0.0
    %463 = vmatprep.subr.mxu0 0.0
    %464 = vmatpush1.msra.mxu0 0.0
    %465 = vmatprep.subr.mxu0 0.0
    %466 = vmatpush1.msra.mxu0 0.0
    %467 = vmatprep.subr.mxu0 0.0
    %468 = vmatpush1.msra.mxu0 0.0
    %469 = vmatprep.subr.mxu0 0.0
    %470 = vmatpush1.msra.mxu0 0.0
    %471 = vmatprep.subr.mxu0 0.0
    %472 = vmatpush1.msra.mxu0 0.0
    %473 = vmatprep.subr.mxu0 0.0
    %474 = vmatpush1.msra.mxu0 0.0
    %475 = vmatprep.subr.mxu0 0.0
    %476 = vmatpush1.msra.mxu0 0.0
    %477 = vmatprep.subr.mxu0 0.0
    %478 = vmatpush1.msra.mxu0 0.0
    %479 = vmatprep.subr.mxu0 0.0
    %480 = vmatpush1.msra.mxu0 0.0
    %481 = vmatprep.subr.mxu0 0.0
    %482 = vmatpush1.msra.mxu0 0.0
    %483 = vmatprep.subr.mxu0 0.0
    %484 = vmatpush1.msra.mxu0 0.0
    %485 = vmatprep.subr.mxu0 0.0
    %486 = vmatpush1.msra.mxu0 0.0
    %487 = vmatprep.mubr.f32.mxu0 0.0
    %488 = vmatmul.mubr.f32.gmra.mrb[0].mxu0 %v364
    %v489 = vpop.f32.mrb[0].mxu0
    %v490 = vadd.f32 %v421, %v489
    %v491 = vpop.f32.mrb[0].mxu0
    %492 = vmatprep.mubr.f32.mxu0 0.0
    %493 = vmatmul.mubr.f32.gmra.mrb[0].mxu0 %v365
    %v494 = vpop.f32.mrb[0].mxu0
    %v495 = vadd.f32 %v421, %v494
    %v496 = vpop.f32.mrb[0].mxu0
    %497 = vdwg.mxu0
    %v498 = vmul.f32 %v364, %v364
    %v499 = vmul.f32 %v365, %v365
    %v500 = vadd.f32 %v498, %v366
    %v501 = vadd.f32 %v499, %v367
    %502 = vmatprep.subr.mxu0 0.0
    %503 = vmatpush1.msra.mxu0 %v384
    %504 = vmatprep.subr.mxu0 0.0
    %505 = vmatpush1.msra.mxu0 %v385
    %506 = vmatprep.subr.mxu0 0.0
    %507 = vmatpush1.msra.mxu0 %v386
    %508 = vmatprep.subr.mxu0 0.0
    %509 = vmatpush1.msra.mxu0 %v387
    %510 = vmatprep.subr.mxu0 0.0
    %511 = vmatpush1.msra.mxu0 %v388
    %512 = vmatprep.subr.mxu0 0.0
    %513 = vmatpush1.msra.mxu0 %v389
    %514 = vmatprep.subr.mxu0 0.0
    %515 = vmatpush1.msra.mxu0 %v390
    %516 = vmatprep.subr.mxu0 0.0
    %517 = vmatpush1.msra.mxu0 %v391
    %518 = vmatprep.subr.mxu0 0.0
    %519 = vmatpush1.msra.mxu0 %v392
    %520 = vmatprep.subr.mxu0 0.0
    %521 = vmatpush1.msra.mxu0 %v393
    %522 = vmatprep.subr.mxu0 0.0
    %523 = vmatpush1.msra.mxu0 %v394
    %524 = vmatprep.subr.mxu0 0.0
    %525 = vmatpush1.msra.mxu0 %v395
    %526 = vmatprep.subr.mxu0 0.0
    %527 = vmatpush1.msra.mxu0 %v396
    %528 = vmatprep.subr.mxu0 0.0
    %529 = vmatpush1.msra.mxu0 %v397
    %530 = vmatprep.subr.mxu0 0.0
    %531 = vmatpush1.msra.mxu0 %v398
    %532 = vmatprep.subr.mxu0 0.0
    %533 = vmatpush1.msra.mxu0 %v399
    %534 = vmatprep.subr.mxu0 0.0
    %535 = vmatpush1.msra.mxu0 %v400
    %536 = vmatprep.subr.mxu0 0.0
    %537 = vmatpush1.msra.mxu0 %v401
    %538 = vmatprep.subr.mxu0 0.0
    %539 = vmatpush1.msra.mxu0 %v402
    %540 = vmatprep.subr.mxu0 0.0
    %541 = vmatpush1.msra.mxu0 %v403
    %542 = vmatprep.subr.mxu0 0.0
    %543 = vmatpush1.msra.mxu0 %v404
    %544 = vmatprep.subr.mxu0 0.0
    %545 = vmatpush1.msra.mxu0 %v405
    %546 = vmatprep.subr.mxu0 0.0
    %547 = vmatpush1.msra.mxu0 %v406
    %548 = vmatprep.subr.mxu0 0.0
    %549 = vmatpush1.msra.mxu0 %v407
    %550 = vmatprep.subr.mxu0 0.0
    %551 = vmatpush1.msra.mxu0 %v408
    %552 = vmatprep.subr.mxu0 0.0
    %553 = vmatpush1.msra.mxu0 %v409
    %554 = vmatprep.subr.mxu0 0.0
    %555 = vmatpush1.msra.mxu0 %v410
    %556 = vmatprep.subr.mxu0 0.0
    %557 = vmatpush1.msra.mxu0 %v411
    %558 = vmatprep.subr.mxu0 0.0
    %559 = vmatpush1.msra.mxu0 %v412
    %560 = vmatprep.subr.mxu0 0.0
    %561 = vmatpush1.msra.mxu0 %v413
    %562 = vmatprep.subr.mxu0 0.0
    %563 = vmatpush1.msra.mxu0 %v414
    %564 = vmatprep.subr.mxu0 0.0
    %565 = vmatpush1.msra.mxu0 %v415
    %566 = vmatprep.mubr.f32.mxu0 %v366
    %567 = vmatmul.mubr.f32.gmra.mrb[0].mxu0 %v500
    %v568 = vpop.f32.mrb[0].mxu0
    %v569 = vadd.f32 0.0, %v568
    %v570 = vpop.f32.mrb[0].mxu0
    %571 = vmatprep.mubr.f32.mxu0 %v367
    %572 = vmatmul.mubr.f32.gmra.mrb[0].mxu0 %v501
    %v573 = vpop.f32.mrb[0].mxu0
    %v574 = vadd.f32 0.0, %v573
    %v575 = vpop.f32.mrb[0].mxu0
    %576 = vdwg.mxu0
    %vm577 = vcmp.gt.f32.partialorder %v490, 0.0
    %vm578 = vcmp.gt.f32.partialorder %v495, 0.0
    %v579 = vmax.f32 %v490, 0.0
    %v580 = vmax.f32 %v495, 0.0
    %v581 = vsel %vm577, %v569, 0.0
    %v582 = vsel %vm578, %v574, 0.0
    %v583 = vld [vmem:[#allocation14] sm:$0xff]
    %v584 = vld [vmem:[#allocation14 + $0x8] sm:$0xff]
    %v585 = vld [vmem:[#allocation14 + $0x10] sm:$0xff]
    %v586 = vld [vmem:[#allocation14 + $0x18] sm:$0xff]
    %v587 = vld [vmem:[#allocation14 + $0x20] sm:$0xff]
    %v588 = vld [vmem:[#allocation14 + $0x28] sm:$0xff]
    %v589 = vld [vmem:[#allocation14 + $0x30] sm:$0xff]
    %v590 = vld [vmem:[#allocation14 + $0x38] sm:$0xff]
    %v591 = vld [vmem:[#allocation14 + $0x40] sm:$0xff]
    %v592 = vld [vmem:[#allocation14 + $0x48] sm:$0xff]
    %v593 = vld [vmem:[#allocation14 + $0x50] sm:$0xff]
    %v594 = vld [vmem:[#allocation14 + $0x58] sm:$0xff]
    %v595 = vld [vmem:[#allocation14 + $0x60] sm:$0xff]
    %v596 = vld [vmem:[#allocation14 + $0x68] sm:$0xff]
    %v597 = vld [vmem:[#allocation14 + $0x70] sm:$0xff]
    %v598 = vld [vmem:[#allocation14 + $0x78] sm:$0xff]
    %v599 = vld [vmem:[#allocation16] sm:$0xff]
    %v600 = vld [vmem:[#allocation16 + $0x8] sm:$0xff]
    %v601 = vld [vmem:[#allocation16 + $0x10] sm:$0xff]
    %v602 = vld [vmem:[#allocation16 + $0x18] sm:$0xff]
    %v603 = vld [vmem:[#allocation16 + $0x20] sm:$0xff]
    %v604 = vld [vmem:[#allocation16 + $0x28] sm:$0xff]
    %v605 = vld [vmem:[#allocation16 + $0x30] sm:$0xff]
    %v606 = vld [vmem:[#allocation16 + $0x38] sm:$0xff]
    %v607 = vld [vmem:[#allocation16 + $0x40] sm:$0xff]
    %v608 = vld [vmem:[#allocation16 + $0x48] sm:$0xff]
    %v609 = vld [vmem:[#allocation16 + $0x50] sm:$0xff]
    %v610 = vld [vmem:[#allocation16 + $0x58] sm:$0xff]
    %v611 = vld [vmem:[#allocation16 + $0x60] sm:$0xff]
    %v612 = vld [vmem:[#allocation16 + $0x68] sm:$0xff]
    %v613 = vld [vmem:[#allocation16 + $0x70] sm:$0xff]
    %v614 = vld [vmem:[#allocation16 + $0x78] sm:$0xff]
    %v615 = vld [vmem:[#allocation16 + $0x80] sm:$0xff]
    %v616 = vld [vmem:[#allocation16 + $0x88] sm:$0xff]
    %v617 = vld [vmem:[#allocation16 + $0x90] sm:$0xff]
    %v618 = vld [vmem:[#allocation16 + $0x98] sm:$0xff]
    %v619 = vld [vmem:[#allocation16 + $0xa0] sm:$0xff]
    %v620 = vld [vmem:[#allocation16 + $0xa8] sm:$0xff]
    %v621 = vld [vmem:[#allocation16 + $0xb0] sm:$0xff]
    %v622 = vld [vmem:[#allocation16 + $0xb8] sm:$0xff]
    %v623 = vld [vmem:[#allocation16 + $0xc0] sm:$0xff]
    %v624 = vld [vmem:[#allocation16 + $0xc8] sm:$0xff]
    %v625 = vld [vmem:[#allocation16 + $0xd0] sm:$0xff]
    %v626 = vld [vmem:[#allocation16 + $0xd8] sm:$0xff]
    %v627 = vld [vmem:[#allocation16 + $0xe0] sm:$0xff]
    %v628 = vld [vmem:[#allocation16 + $0xe8] sm:$0xff]
    %v629 = vld [vmem:[#allocation16 + $0xf0] sm:$0xff]
    %v630 = vld [vmem:[#allocation16 + $0xf8] sm:$0xff]
    %v631 = vld [vmem:[#allocation17] sm:$0x1]
    %v633 = vlaneseq
    %v634 = vshrl.u32 %v633, 7
    %v635 = vsub.s32 0, %v634
    %v636 = vrot.slane %v631, %v635
    %638 = vmatprep.subr.mxu0 0.0
    %639 = vmatpush1.msra.mxu0 %v583
    %640 = vmatprep.subr.mxu0 0.0
    %641 = vmatpush1.msra.mxu0 %v584
    %642 = vmatprep.subr.mxu0 0.0
    %643 = vmatpush1.msra.mxu0 %v585
    %644 = vmatprep.subr.mxu0 0.0
    %645 = vmatpush1.msra.mxu0 %v586
    %646 = vmatprep.subr.mxu0 0.0
    %647 = vmatpush1.msra.mxu0 %v587
    %648 = vmatprep.subr.mxu0 0.0
    %649 = vmatpush1.msra.mxu0 %v588
    %650 = vmatprep.subr.mxu0 0.0
    %651 = vmatpush1.msra.mxu0 %v589
    %652 = vmatprep.subr.mxu0 0.0
    %653 = vmatpush1.msra.mxu0 %v590
    %654 = vmatprep.subr.mxu0 0.0
    %655 = vmatpush1.msra.mxu0 %v591
    %656 = vmatprep.subr.mxu0 0.0
    %657 = vmatpush1.msra.mxu0 %v592
    %658 = vmatprep.subr.mxu0 0.0
    %659 = vmatpush1.msra.mxu0 %v593
    %660 = vmatprep.subr.mxu0 0.0
    %661 = vmatpush1.msra.mxu0 %v594
    %662 = vmatprep.subr.mxu0 0.0
    %663 = vmatpush1.msra.mxu0 %v595
    %664 = vmatprep.subr.mxu0 0.0
    %665 = vmatpush1.msra.mxu0 %v596
    %666 = vmatprep.subr.mxu0 0.0
    %667 = vmatpush1.msra.mxu0 %v597
    %668 = vmatprep.subr.mxu0 0.0
    %669 = vmatpush1.msra.mxu0 %v598
    %670 = vmatprep.subr.mxu0 0.0
    %671 = vmatpush1.msra.mxu0 0.0
    %672 = vmatprep.subr.mxu0 0.0
    %673 = vmatpush1.msra.mxu0 0.0
    %674 = vmatprep.subr.mxu0 0.0
    %675 = vmatpush1.msra.mxu0 0.0
    %676 = vmatprep.subr.mxu0 0.0
    %677 = vmatpush1.msra.mxu0 0.0
    %678 = vmatprep.subr.mxu0 0.0
    %679 = vmatpush1.msra.mxu0 0.0
    %680 = vmatprep.subr.mxu0 0.0
    %681 = vmatpush1.msra.mxu0 0.0
    %682 = vmatprep.subr.mxu0 0.0
    %683 = vmatpush1.msra.mxu0 0.0
    %684 = vmatprep.subr.mxu0 0.0
    %685 = vmatpush1.msra.mxu0 0.0
    %686 = vmatprep.subr.mxu0 0.0
    %687 = vmatpush1.msra.mxu0 0.0
    %688 = vmatprep.subr.mxu0 0.0
    %689 = vmatpush1.msra.mxu0 0.0
    %690 = vmatprep.subr.mxu0 0.0
    %691 = vmatpush1.msra.mxu0 0.0
    %692 = vmatprep.subr.mxu0 0.0
    %693 = vmatpush1.msra.mxu0 0.0
    %694 = vmatprep.subr.mxu0 0.0
    %695 = vmatpush1.msra.mxu0 0.0
    %696 = vmatprep.subr.mxu0 0.0
    %697 = vmatpush1.msra.mxu0 0.0
    %698 = vmatprep.subr.mxu0 0.0
    %699 = vmatpush1.msra.mxu0 0.0
    %700 = vmatprep.subr.mxu0 0.0
    %701 = vmatpush1.msra.mxu0 0.0
    %702 = vmatprep.mubr.f32.mxu0 0.0
    %703 = vmatmul.mubr.f32.gmra.mrb[0].mxu0 %v579
    %v704 = vpop.f32.mrb[0].mxu0
    %v705 = vadd.f32 %v636, %v704
    %v706 = vpop.f32.mrb[0].mxu0
    %707 = vmatprep.mubr.f32.mxu0 0.0
    %708 = vmatmul.mubr.f32.gmra.mrb[0].mxu0 %v580
    %v709 = vpop.f32.mrb[0].mxu0
    %v710 = vadd.f32 %v636, %v709
    %v711 = vpop.f32.mrb[0].mxu0
    %712 = vdwg.mxu0
    %v713 = vmul.f32 %v579, %v579
    %v714 = vmul.f32 %v580, %v580
    %v715 = vadd.f32 %v713, %v581
    %v716 = vadd.f32 %v714, %v582
    %717 = vmatprep.subr.mxu0 0.0
    %718 = vmatpush1.msra.mxu0 %v599
    %719 = vmatprep.subr.mxu0 0.0
    %720 = vmatpush1.msra.mxu0 %v600
    %721 = vmatprep.subr.mxu0 0.0
    %722 = vmatpush1.msra.mxu0 %v601
    %723 = vmatprep.subr.mxu0 0.0
    %724 = vmatpush1.msra.mxu0 %v602
    %725 = vmatprep.subr.mxu0 0.0
    %726 = vmatpush1.msra.mxu0 %v603
    %727 = vmatprep.subr.mxu0 0.0
    %728 = vmatpush1.msra.mxu0 %v604
    %729 = vmatprep.subr.mxu0 0.0
    %730 = vmatpush1.msra.mxu0 %v605
    %731 = vmatprep.subr.mxu0 0.0
    %732 = vmatpush1.msra.mxu0 %v606
    %733 = vmatprep.subr.mxu0 0.0
    %734 = vmatpush1.msra.mxu0 %v607
    %735 = vmatprep.subr.mxu0 0.0
    %736 = vmatpush1.msra.mxu0 %v608
    %737 = vmatprep.subr.mxu0 0.0
    %738 = vmatpush1.msra.mxu0 %v609
    %739 = vmatprep.subr.mxu0 0.0
    %740 = vmatpush1.msra.mxu0 %v610
    %741 = vmatprep.subr.mxu0 0.0
    %742 = vmatpush1.msra.mxu0 %v611
    %743 = vmatprep.subr.mxu0 0.0
    %744 = vmatpush1.msra.mxu0 %v612
    %745 = vmatprep.subr.mxu0 0.0
    %746 = vmatpush1.msra.mxu0 %v613
    %747 = vmatprep.subr.mxu0 0.0
    %748 = vmatpush1.msra.mxu0 %v614
    %749 = vmatprep.subr.mxu0 0.0
    %750 = vmatpush1.msra.mxu0 %v615
    %751 = vmatprep.subr.mxu0 0.0
    %752 = vmatpush1.msra.mxu0 %v616
    %753 = vmatprep.subr.mxu0 0.0
    %754 = vmatpush1.msra.mxu0 %v617
    %755 = vmatprep.subr.mxu0 0.0
    %756 = vmatpush1.msra.mxu0 %v618
    %757 = vmatprep.subr.mxu0 0.0
    %758 = vmatpush1.msra.mxu0 %v619
    %759 = vmatprep.subr.mxu0 0.0
    %760 = vmatpush1.msra.mxu0 %v620
    %761 = vmatprep.subr.mxu0 0.0
    %762 = vmatpush1.msra.mxu0 %v621
    %763 = vmatprep.subr.mxu0 0.0
    %764 = vmatpush1.msra.mxu0 %v622
    %765 = vmatprep.subr.mxu0 0.0
    %766 = vmatpush1.msra.mxu0 %v623
    %767 = vmatprep.subr.mxu0 0.0
    %768 = vmatpush1.msra.mxu0 %v624
    %769 = vmatprep.subr.mxu0 0.0
    %770 = vmatpush1.msra.mxu0 %v625
    %771 = vmatprep.subr.mxu0 0.0
    %772 = vmatpush1.msra.mxu0 %v626
    %773 = vmatprep.subr.mxu0 0.0
    %774 = vmatpush1.msra.mxu0 %v627
    %775 = vmatprep.subr.mxu0 0.0
    %776 = vmatpush1.msra.mxu0 %v628
    %777 = vmatprep.subr.mxu0 0.0
    %778 = vmatpush1.msra.mxu0 %v629
    %779 = vmatprep.subr.mxu0 0.0
    %780 = vmatpush1.msra.mxu0 %v630
    %781 = vmatprep.mubr.f32.mxu0 %v581
    %782 = vmatmul.mubr.f32.gmra.mrb[0].mxu0 %v715
    %v783 = vpop.f32.mrb[0].mxu0
    %v784 = vadd.f32 0.0, %v783
    %v785 = vpop.f32.mrb[0].mxu0
    %786 = vmatprep.mubr.f32.mxu0 %v582
    %787 = vmatmul.mubr.f32.gmra.mrb[0].mxu0 %v716
    %v788 = vpop.f32.mrb[0].mxu0
    %v789 = vadd.f32 0.0, %v788
    %v790 = vpop.f32.mrb[0].mxu0
    %791 = vdwg.mxu0
    %792 = vst [vmem:[#allocation19] sm:$0xff] %v705
    %793 = vst [vmem:[#allocation19 + $0x8] sm:$0xff] %v710
    %794 = vst [vmem:[#allocation20] sm:$0xff] %v784
    %795 = vst [vmem:[#allocation20 + $0x8] sm:$0xff] %v789
    // Predicated region
    $region82: #{tpu_custom_call.1} parent=1 // pred_check
      _
    $region83: #{tpu_custom_call.1} parent=1 // pred_check_branch
      %797 = sbr.rel (0) target = $region85
    $region84: #{tpu_custom_call.1} parent=1 // pred_region
      %s799 = ssub.s32 256, 256
      %800 = vsyncadd [#allocation4], %s799
      %s801 = sshll.u32 [#allocation19], 4
      %s802 = int_to_ptr.vmem [resolvable:$true] %s801
      %807 = dma.vmem_to_hbm [thread:$0]  %s802, 256, %s10, [#allocation4], 128, 128, 8
    $region85: #{tpu_custom_call.1} parent=1 // pred_fallthru
      _
    // Predicated region
    $region86: #{tpu_custom_call.1} parent=1 // pred_check
      _
    $region87: #{tpu_custom_call.1} parent=1 // pred_check_branch
      %809 = sbr.rel (0) target = $region89
    $region88: #{tpu_custom_call.1} parent=1 // pred_region
      %s811 = ssub.s32 256, 256
      %812 = vsyncadd [#allocation21], %s811
      %s813 = sshll.u32 [#allocation20], 4
      %s814 = int_to_ptr.vmem [resolvable:$true] %s813
      %819 = dma.vmem_to_hbm [thread:$0]  %s814, 256, %s11, [#allocation21], 128, 128, 8
    $region89: #{tpu_custom_call.1} parent=1 // pred_fallthru
      _
    // Predicated region
    $region90: #{tpu_custom_call.1} parent=1 // pred_check
      _
    $region91: #{tpu_custom_call.1} parent=1 // pred_check_branch
      %821 = sbr.rel (0) target = $region93
    $region92: #{tpu_custom_call.1} parent=1 // pred_region
      %822 = dma.done [#allocation4], 256
    $region93: #{tpu_custom_call.1} parent=1 // pred_fallthru
      _
    // Predicated region
    $region94: #{tpu_custom_call.1} parent=1 // pred_check
      _
    $region95: #{tpu_custom_call.1} parent=1 // pred_check_branch
      %824 = sbr.rel (0) target = $region97
    $region96: #{tpu_custom_call.1} parent=1 // pred_region
      %825 = dma.done [#allocation21], 256
    $region97: #{tpu_custom_call.1} parent=1 // pred_fallthru
      _
    %826 = vsyncpa [#allocation3], 1
    %827 = vsyncpa [#allocation6], 1
    %828 = vsyncpa [#allocation9], 1
    %829 = vsyncpa [#allocation12], 1
    %830 = vsyncpa [#allocation15], 1
    %831 = vsyncpa [#allocation18], 1
    %832 = vsyncpa [#allocation4], 1
    %833 = vsyncpa [#allocation21], 1

// kernel: tpu_custom_call.1
$region0: #{tpu_custom_call.1}
  #allocation0 [shape = 'u32[]', space=smem, size = 0x4, offset = 0x4, fixed_abs, tag = 'smem constant byte address 0x4 - core index']
  #allocation1 [shape = 'u32[144,128]{1,0:T(1,128)}', space=vmem, size = 0x12000, scoped, tag = 'internal scratch']
  %s0 = inlined_call_operand.hbm [shape: f32[16,128], index: 0, kind: input, shape index: {}]
  %s1 = inlined_call_operand.hbm [shape: f32[128,128], index: 1, kind: input, shape index: {}]
  %s2 = inlined_call_operand.hbm [shape: f32[128,128], index: 2, kind: input, shape index: {}]
  %s3 = inlined_call_operand.hbm [shape: f32[1,128], index: 3, kind: input, shape index: {}]
  %s4 = inlined_call_operand.hbm [shape: f32[128,128], index: 4, kind: input, shape index: {}]
  %s5 = inlined_call_operand.hbm [shape: f32[256,128], index: 5, kind: input, shape index: {}]
  %s6 = inlined_call_operand.hbm [shape: f32[1,128], index: 6, kind: input, shape index: {}]
  %s7 = inlined_call_operand.hbm [shape: f32[128,128], index: 7, kind: input, shape index: {}]
  %s8 = inlined_call_operand.hbm [shape: f32[256,128], index: 8, kind: input, shape index: {}]
  %s9 = inlined_call_operand.hbm [shape: f32[1,128], index: 9, kind: input, shape index: {}]
  %s10 = inlined_call_operand.hbm [shape: f32[16,128], index: 10, kind: output, shape index: {0}]
  %s11 = inlined_call_operand.hbm [shape: f32[16,128], index: 11, kind: output, shape index: {1}]
  %12 = xla_tuple %s10, %s11
  %s13 = sld [smem:[#allocation0]]
  $region98: #{tpu_custom_call.1} parent=0
    _
  %s15 = ssub.s32 1, %s13
  %s16 = scalar_select 0, %s15, %s13
  $region1: #{tpu_custom_call.1} parent=0
    #allocation2 [shape = 'u8[8192]{0}', space=vmem, size = 0x2000, scoped, tag = 'input window, operand 0, single buffered']
    #allocation3 [shape = 's32[1]{0}', space=sflag, size = 0x4, scoped, tag = 'scoped memory for tpu_custom_call.1']
    #allocation4 [shape = 's32[1]{0}', space=sflag, size = 0x4, scoped, tag = 'scoped memory for tpu_custom_call.1']
    #allocation5 [shape = 'u8[65536]{0}', space=vmem, size = 0x10000, scoped, tag = 'input window, operand 1, single buffered']
    #allocation6 [shape = 's32[1]{0}', space=sflag, size = 0x4, scoped, tag = 'scoped memory for tpu_custom_call.1']
    #allocation7 [shape = 'u8[65536]{0}', space=vmem, size = 0x10000, scoped, tag = 'input window, operand 2, single buffered']
    #allocation8 [shape = 'u8[512]{0}', space=vmem, size = 0x400, scoped, tag = 'input window, operand 3, single buffered']
    #allocation9 [shape = 's32[1]{0}', space=sflag, size = 0x4, scoped, tag = 'scoped memory for tpu_custom_call.1']
    #allocation10 [shape = 'u8[65536]{0}', space=vmem, size = 0x10000, scoped, tag = 'input window, operand 4, single buffered']
    #allocation11 [shape = 'u8[131072]{0}', space=vmem, size = 0x20000, scoped, tag = 'input window, operand 5, single buffered']
    #allocation12 [shape = 's32[1]{0}', space=sflag, size = 0x4, scoped, tag = 'scoped memory for tpu_custom_call.1']
    #allocation13 [shape = 'u8[512]{0}', space=vmem, size = 0x400, scoped, tag = 'input window, operand 6, single buffered']
    #allocation14 [shape = 'u8[65536]{0}', space=vmem, size = 0x10000, scoped, tag = 'input window, operand 7, single buffered']
    #allocation15 [shape = 's32[1]{0}', space=sflag, size = 0x4, scoped, tag = 'scoped memory for tpu_custom_call.1']
    #allocation16 [shape = 'u8[131072]{0}', space=vmem, size = 0x20000, scoped, tag = 'input window, operand 8, single buffered']
    #allocation17 [shape = 'u8[512]{0}', space=vmem, size = 0x400, scoped, tag = 'input window, operand 9, single buffered']
    #allocation18 [shape = 's32[1]{0}', space=sflag, size = 0x4, scoped, tag = 'scoped memory for tpu_custom_call.1']
    #allocation19 [shape = 'u8[8192]{0}', space=vmem, size = 0x2000, scoped, tag = 'output window, operand 0, single buffered']
    #allocation20 [shape = 'u8[8192]{0}', space=vmem, size = 0x2000, scoped, tag = 'output window, operand 1, single buffered']
    #allocation21 [shape = 's32[1]{0}', space=sflag, size = 0x4, scoped, tag = 'scoped memory for tpu_custom_call.1']
    %17 = vsyncpa [#allocation3], 0
    %18 = vsyncpa [#allocation6], 0
    %19 = vsyncpa [#allocation9], 0
    %20 = vsyncpa [#allocation12], 0
    %21 = vsyncpa [#allocation15], 0
    %22 = vsyncpa [#allocation18], 0
    %23 = vsyncpa [#allocation4], 0
    %24 = vsyncpa [#allocation21], 0
    // Predicated region
    $region2: #{tpu_custom_call.1} parent=1 // pred_check
      _
    $region3: #{tpu_custom_call.1} parent=1 // pred_check_branch
      %26 = sbr.rel (0) target = $region5
    $region4: #{tpu_custom_call.1} parent=1 // pred_region
      %s28 = ssub.s32 256, 256
      %29 = vsyncadd [#allocation3], %s28
      %s30 = sshll.u32 [#allocation2], 4
      %s31 = int_to_ptr.vmem [resolvable:$true] %s30
      %36 = dma.hbm_to_vmem [thread:$0]  %s0, 256, %s31, [#allocation3], 128, 128, 8
    $region5: #{tpu_custom_call.1} parent=1 // pred_fallthru
      _
    // Predicated region
    $region6: #{tpu_custom_call.1} parent=1 // pred_check
      _
    $region7: #{tpu_custom_call.1} parent=1 // pred_check_branch
      %38 = sbr.rel (0) target = $region9
    $region8: #{tpu_custom_call.1} parent=1 // pred_region
      %s40 = ssub.s32 2048, 2048
      %41 = vsyncadd [#allocation6], %s40
      %s42 = sshll.u32 [#allocation5], 4
      %s43 = int_to_ptr.vmem [resolvable:$true] %s42
      %48 = dma.hbm_to_vmem [thread:$0]  %s1, 2048, %s43, [#allocation6], 128, 128, 8
    $region9: #{tpu_custom_call.1} parent=1 // pred_fallthru
      _
    // Predicated region
    $region10: #{tpu_custom_call.1} parent=1 // pred_check
      _
    $region11: #{tpu_custom_call.1} parent=1 // pred_check_branch
      %50 = sbr.rel (0) target = $region13
    $region12: #{tpu_custom_call.1} parent=1 // pred_region
      %s52 = ssub.s32 2048, 2048
      %53 = vsyncadd [#allocation6], %s52
      %s54 = sshll.u32 [#allocation7], 4
      %s55 = int_to_ptr.vmem [resolvable:$true] %s54
      %60 = dma.hbm_to_vmem [thread:$0]  %s2, 2048, %s55, [#allocation6], 128, 128, 8
    $region13: #{tpu_custom_call.1} parent=1 // pred_fallthru
      _
    // Predicated region
    $region14: #{tpu_custom_call.1} parent=1 // pred_check
      _
    $region15: #{tpu_custom_call.1} parent=1 // pred_check_branch
      %62 = sbr.rel (0) target = $region17
    $region16: #{tpu_custom_call.1} parent=1 // pred_region
      %s64 = ssub.s32 16, 16
      %65 = vsyncadd [#allocation9], %s64
      %s67 = sshll.u32 [#allocation8], 4
      %s68 = int_to_ptr.vmem [resolvable:$true] %s67
      %70 = dma.hbm_to_vmem [thread:$0]  %s3, 16, %s68, [#allocation9]
    $region17: #{tpu_custom_call.1} parent=1 // pred_fallthru
      _
    // Predicated region
    $region18: #{tpu_custom_call.1} parent=1 // pred_check
      _
    $region19: #{tpu_custom_call.1} parent=1 // pred_check_branch
      %72 = sbr.rel (0) target = $region21
    $region20: #{tpu_custom_call.1} parent=1 // pred_region
      %s74 = ssub.s32 2048, 2048
      %75 = vsyncadd [#allocation9], %s74
      %s76 = sshll.u32 [#allocation10], 4
      %s77 = int_to_ptr.vmem [resolvable:$true] %s76
      %82 = dma.hbm_to_vmem [thread:$0]  %s4, 2048, %s77, [#allocation9], 128, 128, 8
    $region21: #{tpu_custom_call.1} parent=1 // pred_fallthru
      _
    // Predicated region
    $region22: #{tpu_custom_call.1} parent=1 // pred_check
      _
    $region23: #{tpu_custom_call.1} parent=1 // pred_check_branch
      %84 = sbr.rel (0) target = $region25
    $region24: #{tpu_custom_call.1} parent=1 // pred_region
      %s86 = ssub.s32 4096, 4096
      %87 = vsyncadd [#allocation12], %s86
      %s88 = sshll.u32 [#allocation11], 4
      %s89 = int_to_ptr.vmem [resolvable:$true] %s88
      %94 = dma.hbm_to_vmem [thread:$0]  %s5, 4096, %s89, [#allocation12], 128, 128, 8
    $region25: #{tpu_custom_call.1} parent=1 // pred_fallthru
      _
    // Predicated region
    $region26: #{tpu_custom_call.1} parent=1 // pred_check
      _
    $region27: #{tpu_custom_call.1} parent=1 // pred_check_branch
      %96 = sbr.rel (0) target = $region29
    $region28: #{tpu_custom_call.1} parent=1 // pred_region
      %s98 = ssub.s32 16, 16
      %99 = vsyncadd [#allocation12], %s98
      %s101 = sshll.u32 [#allocation13], 4
      %s102 = int_to_ptr.vmem [resolvable:$true] %s101
      %104 = dma.hbm_to_vmem [thread:$0]  %s6, 16, %s102, [#allocation12]
    $region29: #{tpu_custom_call.1} parent=1 // pred_fallthru
      _
    // Predicated region
    $region30: #{tpu_custom_call.1} parent=1 // pred_check
      _
    $region31: #{tpu_custom_call.1} parent=1 // pred_check_branch
      %106 = sbr.rel (0) target = $region33
    $region32: #{tpu_custom_call.1} parent=1 // pred_region
      %s108 = ssub.s32 2048, 2048
      %109 = vsyncadd [#allocation15], %s108
      %s110 = sshll.u32 [#allocation14], 4
      %s111 = int_to_ptr.vmem [resolvable:$true] %s110
      %116 = dma.hbm_to_vmem [thread:$0]  %s7, 2048, %s111, [#allocation15], 128, 128, 8
    $region33: #{tpu_custom_call.1} parent=1 // pred_fallthru
      _
    // Predicated region
    $region34: #{tpu_custom_call.1} parent=1 // pred_check
      _
    $region35: #{tpu_custom_call.1} parent=1 // pred_check_branch
      %118 = sbr.rel (0) target = $region37
    $region36: #{tpu_custom_call.1} parent=1 // pred_region
      %s120 = ssub.s32 4096, 4096
      %121 = vsyncadd [#allocation15], %s120
      %s122 = sshll.u32 [#allocation16], 4
      %s123 = int_to_ptr.vmem [resolvable:$true] %s122
      %128 = dma.hbm_to_vmem [thread:$0]  %s8, 4096, %s123, [#allocation15], 128, 128, 8
    $region37: #{tpu_custom_call.1} parent=1 // pred_fallthru
      _
    // Predicated region
    $region38: #{tpu_custom_call.1} parent=1 // pred_check
      _
    $region39: #{tpu_custom_call.1} parent=1 // pred_check_branch
      %130 = sbr.rel (0) target = $region41
    $region40: #{tpu_custom_call.1} parent=1 // pred_region
      %s132 = ssub.s32 16, 16
      %133 = vsyncadd [#allocation18], %s132
      %s135 = sshll.u32 [#allocation17], 4
      %s136 = int_to_ptr.vmem [resolvable:$true] %s135
      %138 = dma.hbm_to_vmem [thread:$0]  %s9, 16, %s136, [#allocation18]
    $region41: #{tpu_custom_call.1} parent=1 // pred_fallthru
      _
    // Predicated region
    $region42: #{tpu_custom_call.1} parent=1 // pred_check
      _
    $region43: #{tpu_custom_call.1} parent=1 // pred_check_branch
      %140 = sbr.rel (0) target = $region45
    $region44: #{tpu_custom_call.1} parent=1 // pred_region
      %141 = dma.done [#allocation3], 256
    $region45: #{tpu_custom_call.1} parent=1 // pred_fallthru
      _
    // Predicated region
    $region46: #{tpu_custom_call.1} parent=1 // pred_check
      _
    $region47: #{tpu_custom_call.1} parent=1 // pred_check_branch
      %143 = sbr.rel (0) target = $region49
    $region48: #{tpu_custom_call.1} parent=1 // pred_region
      %144 = dma.done [#allocation6], 2048
    $region49: #{tpu_custom_call.1} parent=1 // pred_fallthru
      _
    // Predicated region
    $region50: #{tpu_custom_call.1} parent=1 // pred_check
      _
    $region51: #{tpu_custom_call.1} parent=1 // pred_check_branch
      %146 = sbr.rel (0) target = $region53
    $region52: #{tpu_custom_call.1} parent=1 // pred_region
      %147 = dma.done [#allocation6], 2048
    $region53: #{tpu_custom_call.1} parent=1 // pred_fallthru
      _
    // Predicated region
    $region54: #{tpu_custom_call.1} parent=1 // pred_check
      _
    $region55: #{tpu_custom_call.1} parent=1 // pred_check_branch
      %149 = sbr.rel (0) target = $region57
    $region56: #{tpu_custom_call.1} parent=1 // pred_region
      %150 = dma.done [#allocation9], 16
    $region57: #{tpu_custom_call.1} parent=1 // pred_fallthru
      _
    // Predicated region
    $region58: #{tpu_custom_call.1} parent=1 // pred_check
      _
    $region59: #{tpu_custom_call.1} parent=1 // pred_check_branch
      %152 = sbr.rel (0) target = $region61
    $region60: #{tpu_custom_call.1} parent=1 // pred_region
      %153 = dma.done [#allocation9], 2048
    $region61: #{tpu_custom_call.1} parent=1 // pred_fallthru
      _
    // Predicated region
    $region62: #{tpu_custom_call.1} parent=1 // pred_check
      _
    $region63: #{tpu_custom_call.1} parent=1 // pred_check_branch
      %155 = sbr.rel (0) target = $region65
    $region64: #{tpu_custom_call.1} parent=1 // pred_region
      %156 = dma.done [#allocation12], 4096
    $region65: #{tpu_custom_call.1} parent=1 // pred_fallthru
      _
    // Predicated region
    $region66: #{tpu_custom_call.1} parent=1 // pred_check
      _
    $region67: #{tpu_custom_call.1} parent=1 // pred_check_branch
      %158 = sbr.rel (0) target = $region69
    $region68: #{tpu_custom_call.1} parent=1 // pred_region
      %159 = dma.done [#allocation12], 16
    $region69: #{tpu_custom_call.1} parent=1 // pred_fallthru
      _
    // Predicated region
    $region70: #{tpu_custom_call.1} parent=1 // pred_check
      _
    $region71: #{tpu_custom_call.1} parent=1 // pred_check_branch
      %161 = sbr.rel (0) target = $region73
    $region72: #{tpu_custom_call.1} parent=1 // pred_region
      %162 = dma.done [#allocation15], 2048
    $region73: #{tpu_custom_call.1} parent=1 // pred_fallthru
      _
    // Predicated region
    $region74: #{tpu_custom_call.1} parent=1 // pred_check
      _
    $region75: #{tpu_custom_call.1} parent=1 // pred_check_branch
      %164 = sbr.rel (0) target = $region77
    $region76: #{tpu_custom_call.1} parent=1 // pred_region
      %165 = dma.done [#allocation15], 4096
    $region77: #{tpu_custom_call.1} parent=1 // pred_fallthru
      _
    // Predicated region
    $region78: #{tpu_custom_call.1} parent=1 // pred_check
      _
    $region79: #{tpu_custom_call.1} parent=1 // pred_check_branch
      %167 = sbr.rel (0) target = $region81
    $region80: #{tpu_custom_call.1} parent=1 // pred_region
      %168 = dma.done [#allocation18], 16
    $region81: #{tpu_custom_call.1} parent=1 // pred_fallthru
      _
    %v169 = vld [vmem:[#allocation2] sm:$0xff]
    %v170 = vld [vmem:[#allocation2 + $0x8] sm:$0xff]
    %v171 = vld [vmem:[#allocation5] sm:$0xff]
    %v172 = vld [vmem:[#allocation5 + $0x8] sm:$0xff]
    %v173 = vld [vmem:[#allocation5 + $0x10] sm:$0xff]
    %v174 = vld [vmem:[#allocation5 + $0x18] sm:$0xff]
    %v175 = vld [vmem:[#allocation5 + $0x20] sm:$0xff]
    %v176 = vld [vmem:[#allocation5 + $0x28] sm:$0xff]
    %v177 = vld [vmem:[#allocation5 + $0x30] sm:$0xff]
    %v178 = vld [vmem:[#allocation5 + $0x38] sm:$0xff]
    %v179 = vld [vmem:[#allocation5 + $0x40] sm:$0xff]
    %v180 = vld [vmem:[#allocation5 + $0x48] sm:$0xff]
    %v181 = vld [vmem:[#allocation5 + $0x50] sm:$0xff]
    %v182 = vld [vmem:[#allocation5 + $0x58] sm:$0xff]
    %v183 = vld [vmem:[#allocation5 + $0x60] sm:$0xff]
    %v184 = vld [vmem:[#allocation5 + $0x68] sm:$0xff]
    %v185 = vld [vmem:[#allocation5 + $0x70] sm:$0xff]
    %v186 = vld [vmem:[#allocation5 + $0x78] sm:$0xff]
    %v187 = vld [vmem:[#allocation7] sm:$0xff]
    %v188 = vld [vmem:[#allocation7 + $0x8] sm:$0xff]
    %v189 = vld [vmem:[#allocation7 + $0x10] sm:$0xff]
    %v190 = vld [vmem:[#allocation7 + $0x18] sm:$0xff]
    %v191 = vld [vmem:[#allocation7 + $0x20] sm:$0xff]
    %v192 = vld [vmem:[#allocation7 + $0x28] sm:$0xff]
    %v193 = vld [vmem:[#allocation7 + $0x30] sm:$0xff]
    %v194 = vld [vmem:[#allocation7 + $0x38] sm:$0xff]
    %v195 = vld [vmem:[#allocation7 + $0x40] sm:$0xff]
    %v196 = vld [vmem:[#allocation7 + $0x48] sm:$0xff]
    %v197 = vld [vmem:[#allocation7 + $0x50] sm:$0xff]
    %v198 = vld [vmem:[#allocation7 + $0x58] sm:$0xff]
    %v199 = vld [vmem:[#allocation7 + $0x60] sm:$0xff]
    %v200 = vld [vmem:[#allocation7 + $0x68] sm:$0xff]
    %v201 = vld [vmem:[#allocation7 + $0x70] sm:$0xff]
    %v202 = vld [vmem:[#allocation7 + $0x78] sm:$0xff]
    %v203 = vld [vmem:[#allocation8] sm:$0x1]
    %v205 = vlaneseq
    %v206 = vshrl.u32 %v205, 7
    %v207 = vsub.s32 0, %v206
    %v208 = vrot.slane %v203, %v207
    %210 = vmatprep.subr.mxu0 0.0
    %211 = vmatpush1.msra.mxu0 %v171
    %212 = vmatprep.subr.mxu0 0.0
    %213 = vmatpush1.msra.mxu0 %v172
    %214 = vmatprep.subr.mxu0 0.0
    %215 = vmatpush1.msra.mxu0 %v173
    %216 = vmatprep.subr.mxu0 0.0
    %217 = vmatpush1.msra.mxu0 %v174
    %218 = vmatprep.subr.mxu0 0.0
    %219 = vmatpush1.msra.mxu0 %v175
    %220 = vmatprep.subr.mxu0 0.0
    %221 = vmatpush1.msra.mxu0 %v176
    %222 = vmatprep.subr.mxu0 0.0
    %223 = vmatpush1.msra.mxu0 %v177
    %224 = vmatprep.subr.mxu0 0.0
    %225 = vmatpush1.msra.mxu0 %v178
    %226 = vmatprep.subr.mxu0 0.0
    %227 = vmatpush1.msra.mxu0 %v179
    %228 = vmatprep.subr.mxu0 0.0
    %229 = vmatpush1.msra.mxu0 %v180
    %230 = vmatprep.subr.mxu0 0.0
    %231 = vmatpush1.msra.mxu0 %v181
    %232 = vmatprep.subr.mxu0 0.0
    %233 = vmatpush1.msra.mxu0 %v182
    %234 = vmatprep.subr.mxu0 0.0
    %235 = vmatpush1.msra.mxu0 %v183
    %236 = vmatprep.subr.mxu0 0.0
    %237 = vmatpush1.msra.mxu0 %v184
    %238 = vmatprep.subr.mxu0 0.0
    %239 = vmatpush1.msra.mxu0 %v185
    %240 = vmatprep.subr.mxu0 0.0
    %241 = vmatpush1.msra.mxu0 %v186
    %242 = vmatprep.subr.mxu0 0.0
    %243 = vmatpush1.msra.mxu0 0.0
    %244 = vmatprep.subr.mxu0 0.0
    %245 = vmatpush1.msra.mxu0 0.0
    %246 = vmatprep.subr.mxu0 0.0
    %247 = vmatpush1.msra.mxu0 0.0
    %248 = vmatprep.subr.mxu0 0.0
    %249 = vmatpush1.msra.mxu0 0.0
    %250 = vmatprep.subr.mxu0 0.0
    %251 = vmatpush1.msra.mxu0 0.0
    %252 = vmatprep.subr.mxu0 0.0
    %253 = vmatpush1.msra.mxu0 0.0
    %254 = vmatprep.subr.mxu0 0.0
    %255 = vmatpush1.msra.mxu0 0.0
    %256 = vmatprep.subr.mxu0 0.0
    %257 = vmatpush1.msra.mxu0 0.0
    %258 = vmatprep.subr.mxu0 0.0
    %259 = vmatpush1.msra.mxu0 0.0
    %260 = vmatprep.subr.mxu0 0.0
    %261 = vmatpush1.msra.mxu0 0.0
    %262 = vmatprep.subr.mxu0 0.0
    %263 = vmatpush1.msra.mxu0 0.0
    %264 = vmatprep.subr.mxu0 0.0
    %265 = vmatpush1.msra.mxu0 0.0
    %266 = vmatprep.subr.mxu0 0.0
    %267 = vmatpush1.msra.mxu0 0.0
    %268 = vmatprep.subr.mxu0 0.0
    %269 = vmatpush1.msra.mxu0 0.0
    %270 = vmatprep.subr.mxu0 0.0
    %271 = vmatpush1.msra.mxu0 0.0
    %272 = vmatprep.subr.mxu0 0.0
    %273 = vmatpush1.msra.mxu0 0.0
    %274 = vmatprep.mubr.f32.mxu0 0.0
    %275 = vmatmul.mubr.f32.gmra.mrb[0].mxu0 %v169
    %v276 = vpop.f32.mrb[0].mxu0
    %v277 = vadd.f32 %v208, %v276
    %v278 = vpop.f32.mrb[0].mxu0
    %279 = vmatprep.mubr.f32.mxu0 0.0
    %280 = vmatmul.mubr.f32.gmra.mrb[0].mxu0 %v170
    %v281 = vpop.f32.mrb[0].mxu0
    %v282 = vadd.f32 %v208, %v281
    %v283 = vpop.f32.mrb[0].mxu0
    %284 = vdwg.mxu0
    %v285 = vmul.f32 %v169, %v169
    %v286 = vmul.f32 %v170, %v170
    %287 = vmatprep.subr.mxu0 0.0
    %288 = vmatpush1.msra.mxu0 %v187
    %289 = vmatprep.subr.mxu0 0.0
    %290 = vmatpush1.msra.mxu0 %v188
    %291 = vmatprep.subr.mxu0 0.0
    %292 = vmatpush1.msra.mxu0 %v189
    %293 = vmatprep.subr.mxu0 0.0
    %294 = vmatpush1.msra.mxu0 %v190
    %295 = vmatprep.subr.mxu0 0.0
    %296 = vmatpush1.msra.mxu0 %v191
    %297 = vmatprep.subr.mxu0 0.0
    %298 = vmatpush1.msra.mxu0 %v192
    %299 = vmatprep.subr.mxu0 0.0
    %300 = vmatpush1.msra.mxu0 %v193
    %301 = vmatprep.subr.mxu0 0.0
    %302 = vmatpush1.msra.mxu0 %v194
    %303 = vmatprep.subr.mxu0 0.0
    %304 = vmatpush1.msra.mxu0 %v195
    %305 = vmatprep.subr.mxu0 0.0
    %306 = vmatpush1.msra.mxu0 %v196
    %307 = vmatprep.subr.mxu0 0.0
    %308 = vmatpush1.msra.mxu0 %v197
    %309 = vmatprep.subr.mxu0 0.0
    %310 = vmatpush1.msra.mxu0 %v198
    %311 = vmatprep.subr.mxu0 0.0
    %312 = vmatpush1.msra.mxu0 %v199
    %313 = vmatprep.subr.mxu0 0.0
    %314 = vmatpush1.msra.mxu0 %v200
    %315 = vmatprep.subr.mxu0 0.0
    %316 = vmatpush1.msra.mxu0 %v201
    %317 = vmatprep.subr.mxu0 0.0
    %318 = vmatpush1.msra.mxu0 %v202
    %319 = vmatprep.subr.mxu0 0.0
    %320 = vmatpush1.msra.mxu0 0.0
    %321 = vmatprep.subr.mxu0 0.0
    %322 = vmatpush1.msra.mxu0 0.0
    %323 = vmatprep.subr.mxu0 0.0
    %324 = vmatpush1.msra.mxu0 0.0
    %325 = vmatprep.subr.mxu0 0.0
    %326 = vmatpush1.msra.mxu0 0.0
    %327 = vmatprep.subr.mxu0 0.0
    %328 = vmatpush1.msra.mxu0 0.0
    %329 = vmatprep.subr.mxu0 0.0
    %330 = vmatpush1.msra.mxu0 0.0
    %331 = vmatprep.subr.mxu0 0.0
    %332 = vmatpush1.msra.mxu0 0.0
    %333 = vmatprep.subr.mxu0 0.0
    %334 = vmatpush1.msra.mxu0 0.0
    %335 = vmatprep.subr.mxu0 0.0
    %336 = vmatpush1.msra.mxu0 0.0
    %337 = vmatprep.subr.mxu0 0.0
    %338 = vmatpush1.msra.mxu0 0.0
    %339 = vmatprep.subr.mxu0 0.0
    %340 = vmatpush1.msra.mxu0 0.0
    %341 = vmatprep.subr.mxu0 0.0
    %342 = vmatpush1.msra.mxu0 0.0
    %343 = vmatprep.subr.mxu0 0.0
    %344 = vmatpush1.msra.mxu0 0.0
    %345 = vmatprep.subr.mxu0 0.0
    %346 = vmatpush1.msra.mxu0 0.0
    %347 = vmatprep.subr.mxu0 0.0
    %348 = vmatpush1.msra.mxu0 0.0
    %349 = vmatprep.subr.mxu0 0.0
    %350 = vmatpush1.msra.mxu0 0.0
    %351 = vmatprep.mubr.f32.mxu0 0.0
    %352 = vmatmul.mubr.f32.gmra.mrb[0].mxu0 %v285
    %v353 = vpop.f32.mrb[0].mxu0
    %v354 = vadd.f32 0.0, %v353
    %v355 = vpop.f32.mrb[0].mxu0
    %356 = vmatprep.mubr.f32.mxu0 0.0
    %357 = vmatmul.mubr.f32.gmra.mrb[0].mxu0 %v286
    %v358 = vpop.f32.mrb[0].mxu0
    %v359 = vadd.f32 0.0, %v358
    %v360 = vpop.f32.mrb[0].mxu0
    %361 = vdwg.mxu0
    %vm362 = vcmp.gt.f32.partialorder %v277, 0.0
    %vm363 = vcmp.gt.f32.partialorder %v282, 0.0
    %v364 = vmax.f32 %v277, 0.0
    %v365 = vmax.f32 %v282, 0.0
    %v366 = vsel %vm362, %v354, 0.0
    %v367 = vsel %vm363, %v359, 0.0
    %v368 = vld [vmem:[#allocation10] sm:$0xff]
    %v369 = vld [vmem:[#allocation10 + $0x8] sm:$0xff]
    %v370 = vld [vmem:[#allocation10 + $0x10] sm:$0xff]
    %v371 = vld [vmem:[#allocation10 + $0x18] sm:$0xff]
    %v372 = vld [vmem:[#allocation10 + $0x20] sm:$0xff]
    %v373 = vld [vmem:[#allocation10 + $0x28] sm:$0xff]
    %v374 = vld [vmem:[#allocation10 + $0x30] sm:$0xff]
    %v375 = vld [vmem:[#allocation10 + $0x38] sm:$0xff]
    %v376 = vld [vmem:[#allocation10 + $0x40] sm:$0xff]
    %v377 = vld [vmem:[#allocation10 + $0x48] sm:$0xff]
    %v378 = vld [vmem:[#allocation10 + $0x50] sm:$0xff]
    %v379 = vld [vmem:[#allocation10 + $0x58] sm:$0xff]
    %v380 = vld [vmem:[#allocation10 + $0x60] sm:$0xff]
    %v381 = vld [vmem:[#allocation10 + $0x68] sm:$0xff]
    %v382 = vld [vmem:[#allocation10 + $0x70] sm:$0xff]
    %v383 = vld [vmem:[#allocation10 + $0x78] sm:$0xff]
    %v384 = vld [vmem:[#allocation11] sm:$0xff]
    %v385 = vld [vmem:[#allocation11 + $0x8] sm:$0xff]
    %v386 = vld [vmem:[#allocation11 + $0x10] sm:$0xff]
    %v387 = vld [vmem:[#allocation11 + $0x18] sm:$0xff]
    %v388 = vld [vmem:[#allocation11 + $0x20] sm:$0xff]
    %v389 = vld [vmem:[#allocation11 + $0x28] sm:$0xff]
    %v390 = vld [vmem:[#allocation11 + $0x30] sm:$0xff]
    %v391 = vld [vmem:[#allocation11 + $0x38] sm:$0xff]
    %v392 = vld [vmem:[#allocation11 + $0x40] sm:$0xff]
    %v393 = vld [vmem:[#allocation11 + $0x48] sm:$0xff]
    %v394 = vld [vmem:[#allocation11 + $0x50] sm:$0xff]
    %v395 = vld [vmem:[#allocation11 + $0x58] sm:$0xff]
    %v396 = vld [vmem:[#allocation11 + $0x60] sm:$0xff]
    %v397 = vld [vmem:[#allocation11 + $0x68] sm:$0xff]
    %v398 = vld [vmem:[#allocation11 + $0x70] sm:$0xff]
    %v399 = vld [vmem:[#allocation11 + $0x78] sm:$0xff]
    %v400 = vld [vmem:[#allocation11 + $0x80] sm:$0xff]
    %v401 = vld [vmem:[#allocation11 + $0x88] sm:$0xff]
    %v402 = vld [vmem:[#allocation11 + $0x90] sm:$0xff]
    %v403 = vld [vmem:[#allocation11 + $0x98] sm:$0xff]
    %v404 = vld [vmem:[#allocation11 + $0xa0] sm:$0xff]
    %v405 = vld [vmem:[#allocation11 + $0xa8] sm:$0xff]
    %v406 = vld [vmem:[#allocation11 + $0xb0] sm:$0xff]
    %v407 = vld [vmem:[#allocation11 + $0xb8] sm:$0xff]
    %v408 = vld [vmem:[#allocation11 + $0xc0] sm:$0xff]
    %v409 = vld [vmem:[#allocation11 + $0xc8] sm:$0xff]
    %v410 = vld [vmem:[#allocation11 + $0xd0] sm:$0xff]
    %v411 = vld [vmem:[#allocation11 + $0xd8] sm:$0xff]
    %v412 = vld [vmem:[#allocation11 + $0xe0] sm:$0xff]
    %v413 = vld [vmem:[#allocation11 + $0xe8] sm:$0xff]
    %v414 = vld [vmem:[#allocation11 + $0xf0] sm:$0xff]
    %v415 = vld [vmem:[#allocation11 + $0xf8] sm:$0xff]
    %v416 = vld [vmem:[#allocation13] sm:$0x1]
    %v418 = vlaneseq
    %v419 = vshrl.u32 %v418, 7
    %v420 = vsub.s32 0, %v419
    %v421 = vrot.slane %v416, %v420
    %423 = vmatprep.subr.mxu0 0.0
    %424 = vmatpush1.msra.mxu0 %v368
    %425 = vmatprep.subr.mxu0 0.0
    %426 = vmatpush1.msra.mxu0 %v369
    %427 = vmatprep.subr.mxu0 0.0
    %428 = vmatpush1.msra.mxu0 %v370
    %429 = vmatprep.subr.mxu0 0.0
    %430 = vmatpush1.msra.mxu0 %v371
    %431 = vmatprep.subr.mxu0 0.0
    %432 = vmatpush1.msra.mxu0 %v372
    %433 = vmatprep.subr.mxu0 0.0
    %434 = vmatpush1.msra.mxu0 %v373
    %435 = vmatprep.subr.mxu0 0.0
    %436 = vmatpush1.msra.mxu0 %v374
    %437 = vmatprep.subr.mxu0 0.0
    %438 = vmatpush1.msra.mxu0 %v375
    %439 = vmatprep.subr.mxu0 0.0
    %440 = vmatpush1.msra.mxu0 %v376
    %441 = vmatprep.subr.mxu0 0.0
    %442 = vmatpush1.msra.mxu0 %v377
    %443 = vmatprep.subr.mxu0 0.0
    %444 = vmatpush1.msra.mxu0 %v378
    %445 = vmatprep.subr.mxu0 0.0
    %446 = vmatpush1.msra.mxu0 %v379
    %447 = vmatprep.subr.mxu0 0.0
    %448 = vmatpush1.msra.mxu0 %v380
    %449 = vmatprep.subr.mxu0 0.0
    %450 = vmatpush1.msra.mxu0 %v381
    %451 = vmatprep.subr.mxu0 0.0
    %452 = vmatpush1.msra.mxu0 %v382
    %453 = vmatprep.subr.mxu0 0.0
    %454 = vmatpush1.msra.mxu0 %v383
    %455 = vmatprep.subr.mxu0 0.0
    %456 = vmatpush1.msra.mxu0 0.0
    %457 = vmatprep.subr.mxu0 0.0
    %458 = vmatpush1.msra.mxu0 0.0
    %459 = vmatprep.subr.mxu0 0.0
    %460 = vmatpush1.msra.mxu0 0.0
    %461 = vmatprep.subr.mxu0 0.0
    %462 = vmatpush1.msra.mxu0 0.0
    %463 = vmatprep.subr.mxu0 0.0
    %464 = vmatpush1.msra.mxu0 0.0
    %465 = vmatprep.subr.mxu0 0.0
    %466 = vmatpush1.msra.mxu0 0.0
    %467 = vmatprep.subr.mxu0 0.0
    %468 = vmatpush1.msra.mxu0 0.0
    %469 = vmatprep.subr.mxu0 0.0
    %470 = vmatpush1.msra.mxu0 0.0
    %471 = vmatprep.subr.mxu0 0.0
    %472 = vmatpush1.msra.mxu0 0.0
    %473 = vmatprep.subr.mxu0 0.0
    %474 = vmatpush1.msra.mxu0 0.0
    %475 = vmatprep.subr.mxu0 0.0
    %476 = vmatpush1.msra.mxu0 0.0
    %477 = vmatprep.subr.mxu0 0.0
    %478 = vmatpush1.msra.mxu0 0.0
    %479 = vmatprep.subr.mxu0 0.0
    %480 = vmatpush1.msra.mxu0 0.0
    %481 = vmatprep.subr.mxu0 0.0
    %482 = vmatpush1.msra.mxu0 0.0
    %483 = vmatprep.subr.mxu0 0.0
    %484 = vmatpush1.msra.mxu0 0.0
    %485 = vmatprep.subr.mxu0 0.0
    %486 = vmatpush1.msra.mxu0 0.0
    %487 = vmatprep.mubr.f32.mxu0 0.0
    %488 = vmatmul.mubr.f32.gmra.mrb[0].mxu0 %v364
    %v489 = vpop.f32.mrb[0].mxu0
    %v490 = vadd.f32 %v421, %v489
    %v491 = vpop.f32.mrb[0].mxu0
    %492 = vmatprep.mubr.f32.mxu0 0.0
    %493 = vmatmul.mubr.f32.gmra.mrb[0].mxu0 %v365
    %v494 = vpop.f32.mrb[0].mxu0
    %v495 = vadd.f32 %v421, %v494
    %v496 = vpop.f32.mrb[0].mxu0
    %497 = vdwg.mxu0
    %v498 = vmul.f32 %v364, %v364
    %v499 = vmul.f32 %v365, %v365
    %v500 = vadd.f32 %v498, %v366
    %v501 = vadd.f32 %v499, %v367
    %502 = vmatprep.subr.mxu0 0.0
    %503 = vmatpush1.msra.mxu0 %v384
    %504 = vmatprep.subr.mxu0 0.0
    %505 = vmatpush1.msra.mxu0 %v385
    %506 = vmatprep.subr.mxu0 0.0
    %507 = vmatpush1.msra.mxu0 %v386
    %508 = vmatprep.subr.mxu0 0.0
    %509 = vmatpush1.msra.mxu0 %v387
    %510 = vmatprep.subr.mxu0 0.0
    %511 = vmatpush1.msra.mxu0 %v388
    %512 = vmatprep.subr.mxu0 0.0
    %513 = vmatpush1.msra.mxu0 %v389
    %514 = vmatprep.subr.mxu0 0.0
    %515 = vmatpush1.msra.mxu0 %v390
    %516 = vmatprep.subr.mxu0 0.0
    %517 = vmatpush1.msra.mxu0 %v391
    %518 = vmatprep.subr.mxu0 0.0
    %519 = vmatpush1.msra.mxu0 %v392
    %520 = vmatprep.subr.mxu0 0.0
    %521 = vmatpush1.msra.mxu0 %v393
    %522 = vmatprep.subr.mxu0 0.0
    %523 = vmatpush1.msra.mxu0 %v394
    %524 = vmatprep.subr.mxu0 0.0
    %525 = vmatpush1.msra.mxu0 %v395
    %526 = vmatprep.subr.mxu0 0.0
    %527 = vmatpush1.msra.mxu0 %v396
    %528 = vmatprep.subr.mxu0 0.0
    %529 = vmatpush1.msra.mxu0 %v397
    %530 = vmatprep.subr.mxu0 0.0
    %531 = vmatpush1.msra.mxu0 %v398
    %532 = vmatprep.subr.mxu0 0.0
    %533 = vmatpush1.msra.mxu0 %v399
    %534 = vmatprep.subr.mxu0 0.0
    %535 = vmatpush1.msra.mxu0 %v400
    %536 = vmatprep.subr.mxu0 0.0
    %537 = vmatpush1.msra.mxu0 %v401
    %538 = vmatprep.subr.mxu0 0.0
    %539 = vmatpush1.msra.mxu0 %v402
    %540 = vmatprep.subr.mxu0 0.0
    %541 = vmatpush1.msra.mxu0 %v403
    %542 = vmatprep.subr.mxu0 0.0
    %543 = vmatpush1.msra.mxu0 %v404
    %544 = vmatprep.subr.mxu0 0.0
    %545 = vmatpush1.msra.mxu0 %v405
    %546 = vmatprep.subr.mxu0 0.0
    %547 = vmatpush1.msra.mxu0 %v406
    %548 = vmatprep.subr.mxu0 0.0
    %549 = vmatpush1.msra.mxu0 %v407
    %550 = vmatprep.subr.mxu0 0.0
    %551 = vmatpush1.msra.mxu0 %v408
    %552 = vmatprep.subr.mxu0 0.0
    %553 = vmatpush1.msra.mxu0 %v409
    %554 = vmatprep.subr.mxu0 0.0
    %555 = vmatpush1.msra.mxu0 %v410
    %556 = vmatprep.subr.mxu0 0.0
    %557 = vmatpush1.msra.mxu0 %v411
    %558 = vmatprep.subr.mxu0 0.0
    %559 = vmatpush1.msra.mxu0 %v412
    %560 = vmatprep.subr.mxu0 0.0
    %561 = vmatpush1.msra.mxu0 %v413
    %562 = vmatprep.subr.mxu0 0.0
    %563 = vmatpush1.msra.mxu0 %v414
    %564 = vmatprep.subr.mxu0 0.0
    %565 = vmatpush1.msra.mxu0 %v415
    %566 = vmatprep.mubr.f32.mxu0 %v366
    %567 = vmatmul.mubr.f32.gmra.mrb[0].mxu0 %v500
    %v568 = vpop.f32.mrb[0].mxu0
    %v569 = vadd.f32 0.0, %v568
    %v570 = vpop.f32.mrb[0].mxu0
    %571 = vmatprep.mubr.f32.mxu0 %v367
    %572 = vmatmul.mubr.f32.gmra.mrb[0].mxu0 %v501
    %v573 = vpop.f32.mrb[0].mxu0
    %v574 = vadd.f32 0.0, %v573
    %v575 = vpop.f32.mrb[0].mxu0
    %576 = vdwg.mxu0
    %vm577 = vcmp.gt.f32.partialorder %v490, 0.0
    %vm578 = vcmp.gt.f32.partialorder %v495, 0.0
    %v579 = vmax.f32 %v490, 0.0
    %v580 = vmax.f32 %v495, 0.0
    %v581 = vsel %vm577, %v569, 0.0
    %v582 = vsel %vm578, %v574, 0.0
    %v583 = vld [vmem:[#allocation14] sm:$0xff]
    %v584 = vld [vmem:[#allocation14 + $0x8] sm:$0xff]
    %v585 = vld [vmem:[#allocation14 + $0x10] sm:$0xff]
    %v586 = vld [vmem:[#allocation14 + $0x18] sm:$0xff]
    %v587 = vld [vmem:[#allocation14 + $0x20] sm:$0xff]
    %v588 = vld [vmem:[#allocation14 + $0x28] sm:$0xff]
    %v589 = vld [vmem:[#allocation14 + $0x30] sm:$0xff]
    %v590 = vld [vmem:[#allocation14 + $0x38] sm:$0xff]
    %v591 = vld [vmem:[#allocation14 + $0x40] sm:$0xff]
    %v592 = vld [vmem:[#allocation14 + $0x48] sm:$0xff]
    %v593 = vld [vmem:[#allocation14 + $0x50] sm:$0xff]
    %v594 = vld [vmem:[#allocation14 + $0x58] sm:$0xff]
    %v595 = vld [vmem:[#allocation14 + $0x60] sm:$0xff]
    %v596 = vld [vmem:[#allocation14 + $0x68] sm:$0xff]
    %v597 = vld [vmem:[#allocation14 + $0x70] sm:$0xff]
    %v598 = vld [vmem:[#allocation14 + $0x78] sm:$0xff]
    %v599 = vld [vmem:[#allocation16] sm:$0xff]
    %v600 = vld [vmem:[#allocation16 + $0x8] sm:$0xff]
    %v601 = vld [vmem:[#allocation16 + $0x10] sm:$0xff]
    %v602 = vld [vmem:[#allocation16 + $0x18] sm:$0xff]
    %v603 = vld [vmem:[#allocation16 + $0x20] sm:$0xff]
    %v604 = vld [vmem:[#allocation16 + $0x28] sm:$0xff]
    %v605 = vld [vmem:[#allocation16 + $0x30] sm:$0xff]
    %v606 = vld [vmem:[#allocation16 + $0x38] sm:$0xff]
    %v607 = vld [vmem:[#allocation16 + $0x40] sm:$0xff]
    %v608 = vld [vmem:[#allocation16 + $0x48] sm:$0xff]
    %v609 = vld [vmem:[#allocation16 + $0x50] sm:$0xff]
    %v610 = vld [vmem:[#allocation16 + $0x58] sm:$0xff]
    %v611 = vld [vmem:[#allocation16 + $0x60] sm:$0xff]
    %v612 = vld [vmem:[#allocation16 + $0x68] sm:$0xff]
    %v613 = vld [vmem:[#allocation16 + $0x70] sm:$0xff]
    %v614 = vld [vmem:[#allocation16 + $0x78] sm:$0xff]
    %v615 = vld [vmem:[#allocation16 + $0x80] sm:$0xff]
    %v616 = vld [vmem:[#allocation16 + $0x88] sm:$0xff]
    %v617 = vld [vmem:[#allocation16 + $0x90] sm:$0xff]
    %v618 = vld [vmem:[#allocation16 + $0x98] sm:$0xff]
    %v619 = vld [vmem:[#allocation16 + $0xa0] sm:$0xff]
    %v620 = vld [vmem:[#allocation16 + $0xa8] sm:$0xff]
    %v621 = vld [vmem:[#allocation16 + $0xb0] sm:$0xff]
    %v622 = vld [vmem:[#allocation16 + $0xb8] sm:$0xff]
    %v623 = vld [vmem:[#allocation16 + $0xc0] sm:$0xff]
    %v624 = vld [vmem:[#allocation16 + $0xc8] sm:$0xff]
    %v625 = vld [vmem:[#allocation16 + $0xd0] sm:$0xff]
    %v626 = vld [vmem:[#allocation16 + $0xd8] sm:$0xff]
    %v627 = vld [vmem:[#allocation16 + $0xe0] sm:$0xff]
    %v628 = vld [vmem:[#allocation16 + $0xe8] sm:$0xff]
    %v629 = vld [vmem:[#allocation16 + $0xf0] sm:$0xff]
    %v630 = vld [vmem:[#allocation16 + $0xf8] sm:$0xff]
    %v631 = vld [vmem:[#allocation17] sm:$0x1]
    %v633 = vlaneseq
    %v634 = vshrl.u32 %v633, 7
    %v635 = vsub.s32 0, %v634
    %v636 = vrot.slane %v631, %v635
    %638 = vmatprep.subr.mxu0 0.0
    %639 = vmatpush1.msra.mxu0 %v583
    %640 = vmatprep.subr.mxu0 0.0
    %641 = vmatpush1.msra.mxu0 %v584
    %642 = vmatprep.subr.mxu0 0.0
    %643 = vmatpush1.msra.mxu0 %v585
    %644 = vmatprep.subr.mxu0 0.0
    %645 = vmatpush1.msra.mxu0 %v586
    %646 = vmatprep.subr.mxu0 0.0
    %647 = vmatpush1.msra.mxu0 %v587
    %648 = vmatprep.subr.mxu0 0.0
    %649 = vmatpush1.msra.mxu0 %v588
    %650 = vmatprep.subr.mxu0 0.0
    %651 = vmatpush1.msra.mxu0 %v589
    %652 = vmatprep.subr.mxu0 0.0
    %653 = vmatpush1.msra.mxu0 %v590
    %654 = vmatprep.subr.mxu0 0.0
    %655 = vmatpush1.msra.mxu0 %v591
    %656 = vmatprep.subr.mxu0 0.0
    %657 = vmatpush1.msra.mxu0 %v592
    %658 = vmatprep.subr.mxu0 0.0
    %659 = vmatpush1.msra.mxu0 %v593
    %660 = vmatprep.subr.mxu0 0.0
    %661 = vmatpush1.msra.mxu0 %v594
    %662 = vmatprep.subr.mxu0 0.0
    %663 = vmatpush1.msra.mxu0 %v595
    %664 = vmatprep.subr.mxu0 0.0
    %665 = vmatpush1.msra.mxu0 %v596
    %666 = vmatprep.subr.mxu0 0.0
    %667 = vmatpush1.msra.mxu0 %v597
    %668 = vmatprep.subr.mxu0 0.0
    %669 = vmatpush1.msra.mxu0 %v598
    %670 = vmatprep.subr.mxu0 0.0
    %671 = vmatpush1.msra.mxu0 0.0
    %672 = vmatprep.subr.mxu0 0.0
    %673 = vmatpush1.msra.mxu0 0.0
    %674 = vmatprep.subr.mxu0 0.0
    %675 = vmatpush1.msra.mxu0 0.0
    %676 = vmatprep.subr.mxu0 0.0
    %677 = vmatpush1.msra.mxu0 0.0
    %678 = vmatprep.subr.mxu0 0.0
    %679 = vmatpush1.msra.mxu0 0.0
    %680 = vmatprep.subr.mxu0 0.0
    %681 = vmatpush1.msra.mxu0 0.0
    %682 = vmatprep.subr.mxu0 0.0
    %683 = vmatpush1.msra.mxu0 0.0
    %684 = vmatprep.subr.mxu0 0.0
    %685 = vmatpush1.msra.mxu0 0.0
    %686 = vmatprep.subr.mxu0 0.0
    %687 = vmatpush1.msra.mxu0 0.0
    %688 = vmatprep.subr.mxu0 0.0
    %689 = vmatpush1.msra.mxu0 0.0
    %690 = vmatprep.subr.mxu0 0.0
    %691 = vmatpush1.msra.mxu0 0.0
    %692 = vmatprep.subr.mxu0 0.0
    %693 = vmatpush1.msra.mxu0 0.0
    %694 = vmatprep.subr.mxu0 0.0
    %695 = vmatpush1.msra.mxu0 0.0
    %696 = vmatprep.subr.mxu0 0.0
    %697 = vmatpush1.msra.mxu0 0.0
    %698 = vmatprep.subr.mxu0 0.0
    %699 = vmatpush1.msra.mxu0 0.0
    %700 = vmatprep.subr.mxu0 0.0
    %701 = vmatpush1.msra.mxu0 0.0
    %702 = vmatprep.mubr.f32.mxu0 0.0
    %703 = vmatmul.mubr.f32.gmra.mrb[0].mxu0 %v579
    %v704 = vpop.f32.mrb[0].mxu0
    %v705 = vadd.f32 %v636, %v704
    %v706 = vpop.f32.mrb[0].mxu0
    %707 = vmatprep.mubr.f32.mxu0 0.0
    %708 = vmatmul.mubr.f32.gmra.mrb[0].mxu0 %v580
    %v709 = vpop.f32.mrb[0].mxu0
    %v710 = vadd.f32 %v636, %v709
    %v711 = vpop.f32.mrb[0].mxu0
    %712 = vdwg.mxu0
    %v713 = vmul.f32 %v579, %v579
    %v714 = vmul.f32 %v580, %v580
    %v715 = vadd.f32 %v713, %v581
    %v716 = vadd.f32 %v714, %v582
    %717 = vmatprep.subr.mxu0 0.0
    %718 = vmatpush1.msra.mxu0 %v599
    %719 = vmatprep.subr.mxu0 0.0
    %720 = vmatpush1.msra.mxu0 %v600
    %721 = vmatprep.subr.mxu0 0.0
    %722 = vmatpush1.msra.mxu0 %v601
    %723 = vmatprep.subr.mxu0 0.0
    %724 = vmatpush1.msra.mxu0 %v602
    %725 = vmatprep.subr.mxu0 0.0
    %726 = vmatpush1.msra.mxu0 %v603
    %727 = vmatprep.subr.mxu0 0.0
    %728 = vmatpush1.msra.mxu0 %v604
    %729 = vmatprep.subr.mxu0 0.0
    %730 = vmatpush1.msra.mxu0 %v605
    %731 = vmatprep.subr.mxu0 0.0
    %732 = vmatpush1.msra.mxu0 %v606
    %733 = vmatprep.subr.mxu0 0.0
    %734 = vmatpush1.msra.mxu0 %v607
    %735 = vmatprep.subr.mxu0 0.0
    %736 = vmatpush1.msra.mxu0 %v608
    %737 = vmatprep.subr.mxu0 0.0
    %738 = vmatpush1.msra.mxu0 %v609
    %739 = vmatprep.subr.mxu0 0.0
    %740 = vmatpush1.msra.mxu0 %v610
    %741 = vmatprep.subr.mxu0 0.0
    %742 = vmatpush1.msra.mxu0 %v611
    %743 = vmatprep.subr.mxu0 0.0
    %744 = vmatpush1.msra.mxu0 %v612
    %745 = vmatprep.subr.mxu0 0.0
    %746 = vmatpush1.msra.mxu0 %v613
    %747 = vmatprep.subr.mxu0 0.0
    %748 = vmatpush1.msra.mxu0 %v614
    %749 = vmatprep.subr.mxu0 0.0
    %750 = vmatpush1.msra.mxu0 %v615
    %751 = vmatprep.subr.mxu0 0.0
    %752 = vmatpush1.msra.mxu0 %v616
    %753 = vmatprep.subr.mxu0 0.0
    %754 = vmatpush1.msra.mxu0 %v617
    %755 = vmatprep.subr.mxu0 0.0
    %756 = vmatpush1.msra.mxu0 %v618
    %757 = vmatprep.subr.mxu0 0.0
    %758 = vmatpush1.msra.mxu0 %v619
    %759 = vmatprep.subr.mxu0 0.0
    %760 = vmatpush1.msra.mxu0 %v620
    %761 = vmatprep.subr.mxu0 0.0
    %762 = vmatpush1.msra.mxu0 %v621
    %763 = vmatprep.subr.mxu0 0.0
    %764 = vmatpush1.msra.mxu0 %v622
    %765 = vmatprep.subr.mxu0 0.0
    %766 = vmatpush1.msra.mxu0 %v623
    %767 = vmatprep.subr.mxu0 0.0
    %768 = vmatpush1.msra.mxu0 %v624
    %769 = vmatprep.subr.mxu0 0.0
    %770 = vmatpush1.msra.mxu0 %v625
    %771 = vmatprep.subr.mxu0 0.0
    %772 = vmatpush1.msra.mxu0 %v626
    %773 = vmatprep.subr.mxu0 0.0
    %774 = vmatpush1.msra.mxu0 %v627
    %775 = vmatprep.subr.mxu0 0.0
    %776 = vmatpush1.msra.mxu0 %v628
    %777 = vmatprep.subr.mxu0 0.0
    %778 = vmatpush1.msra.mxu0 %v629
    %779 = vmatprep.subr.mxu0 0.0
    %780 = vmatpush1.msra.mxu0 %v630
    %781 = vmatprep.mubr.f32.mxu0 %v581
    %782 = vmatmul.mubr.f32.gmra.mrb[0].mxu0 %v715
    %v783 = vpop.f32.mrb[0].mxu0
    %v784 = vadd.f32 0.0, %v783
    %v785 = vpop.f32.mrb[0].mxu0
    %786 = vmatprep.mubr.f32.mxu0 %v582
    %787 = vmatmul.mubr.f32.gmra.mrb[0].mxu0 %v716
    %v788 = vpop.f32.mrb[0].mxu0
    %v789 = vadd.f32 0.0, %v788
    %v790 = vpop.f32.mrb[0].mxu0
    %791 = vdwg.mxu0
    %792 = vst [vmem:[#allocation19] sm:$0xff] %v705
    %793 = vst [vmem:[#allocation19 + $0x8] sm:$0xff] %v710
    %794 = vst [vmem:[#allocation20] sm:$0xff] %v784
    %795 = vst [vmem:[#allocation20 + $0x8] sm:$0xff] %v789
    // Predicated region
    $region82: #{tpu_custom_call.1} parent=1 // pred_check
      _
    $region83: #{tpu_custom_call.1} parent=1 // pred_check_branch
      %797 = sbr.rel (0) target = $region85
    $region84: #{tpu_custom_call.1} parent=1 // pred_region
      %s799 = ssub.s32 256, 256
      %800 = vsyncadd [#allocation4], %s799
      %s801 = sshll.u32 [#allocation19], 4
      %s802 = int_to_ptr.vmem [resolvable:$true] %s801
      %807 = dma.vmem_to_hbm [thread:$0]  %s802, 256, %s10, [#allocation4], 128, 128, 8
    $region85: #{tpu_custom_call.1} parent=1 // pred_fallthru
      _
    // Predicated region
    $region86: #{tpu_custom_call.1} parent=1 // pred_check
      _
    $region87: #{tpu_custom_call.1} parent=1 // pred_check_branch
      %809 = sbr.rel (0) target = $region89
    $region88: #{tpu_custom_call.1} parent=1 // pred_region
      %s811 = ssub.s32 256, 256
      %812 = vsyncadd [#allocation21], %s811
      %s813 = sshll.u32 [#allocation20], 4
      %s814 = int_to_ptr.vmem [resolvable:$true] %s813
      %819 = dma.vmem_to_hbm [thread:$0]  %s814, 256, %s11, [#allocation21], 128, 128, 8
    $region89: #{tpu_custom_call.1} parent=1 // pred_fallthru
      _
    // Predicated region
    $region90: #{tpu_custom_call.1} parent=1 // pred_check
      _
    $region91: #{tpu_custom_call.1} parent=1 // pred_check_branch
      %821 = sbr.rel (0) target = $region93
    $region92: #{tpu_custom_call.1} parent=1 // pred_region
      %822 = dma.done [#allocation4], 256
    $region93: #{tpu_custom_call.1} parent=1 // pred_fallthru
      _
    // Predicated region
    $region94: #{tpu_custom_call.1} parent=1 // pred_check
      _
    $region95: #{tpu_custom_call.1} parent=1 // pred_check_branch
      %824 = sbr.rel (0) target = $region97
    $region96: #{tpu_custom_call.1} parent=1 // pred_region
      %825 = dma.done [#allocation21], 256
    $region97: #{tpu_custom_call.1} parent=1 // pred_fallthru
      _
    %826 = vsyncpa [#allocation3], 1
    %827 = vsyncpa [#allocation6], 1
    %828 = vsyncpa [#allocation9], 1
    %829 = vsyncpa [#allocation12], 1
    %830 = vsyncpa [#allocation15], 1
    %831 = vsyncpa [#allocation18], 1
    %832 = vsyncpa [#allocation4], 1
    %833 = vsyncpa [#allocation21], 1

</llo_original>
